<compile_context>
chip_gen: v7x
topology: tpu7x:2x2x1
jax: 0.10.0
libtpu: 0.0.40
codegen_flags: <defaults>
</compile_context>

<pallas_src>
import jax
import jax.numpy as jnp
from jax.experimental import pallas as pl
from jax.experimental.pallas import tpu as pltpu


STATE_SIZE = 213
STATE_PAD = 256          # fc1 contraction dim padded to a lane-aligned 256
HIDDEN1 = 1024
HIDDEN2 = 128
ACTION_SIZE = 2
OUT_PAD = 128            # lane-dense padded output width
H1_CHUNK = 256           # fc1->fc2 fusion chunk along HIDDEN1
N_CHUNKS = HIDDEN1 // H1_CHUNK


def _round_up(n, m):
    return ((n + m - 1) // m) * m


def dqn_mlp_kernel(x_ref, w1_ref, b1_ref, w2_ref, b2_ref, w3_ref, b3_ref, o_ref):
    x = x_ref[...]                                        # (tile_b, 256) bf16
    h2 = jnp.zeros((x.shape[0], HIDDEN2), jnp.float32)
    # Fused fc1 + ReLU + fc2, chunked over HIDDEN1 so the (tile_b, 1024) f32
    # intermediate never materializes; each h1 chunk is consumed immediately.
    for c in range(N_CHUNKS):
        lo = c * H1_CHUNK
        hi = lo + H1_CHUNK
        h1c = jnp.dot(x, w1_ref[:, lo:hi], preferred_element_type=jnp.float32)
        h1c = jnp.maximum(h1c + b1_ref[:, lo:hi], 0.0)
        h2 = h2 + jnp.dot(h1c.astype(jnp.bfloat16), w2_ref[lo:hi, :],
                          preferred_element_type=jnp.float32)
    h2 = jnp.maximum(h2 + b2_ref[...], 0.0)
    # fc3 (no activation), lane-dense (tile_b, 128) f32 store.
    out = jnp.dot(h2.astype(jnp.bfloat16), w3_ref[...],
                  preferred_element_type=jnp.float32)
    o_ref[...] = (out + b3_ref[...]).astype(o_ref.dtype)


def _choose_tile(B, tile_b):
    """Pick the batch tile.

    - Tiny batches: one tile, rounded up only to a multiple of 16 (bf16 sublane
      packing), not 128 -- avoids 16x wasted MXU/DMA work at B=8.
    - Larger batches: tile is a multiple of 128, capped so the parallel grid axis
      has >= 2 steps when the padded batch spans >= 256 rows (both v7x TCs used).
    """
    if B <= 128:
        return _round_up(max(B, 16), 16)
    tile = min(tile_b, _round_up(B, 128))
    b_pad_min = _round_up(B, 128)
    if b_pad_min >= 256:
        half = max(((b_pad_min // 2) // 128) * 128, 128)
        tile = min(tile, half)
    return max(tile, 128)


def dqn_forward(x, kernel_params, tile_b=512):
    """Fused forward pass. x: (B, STATE_SIZE) f32. Returns (B, ACTION_SIZE) f32."""
    w1, b1, w2, b2, w3, b3 = kernel_params
    B = x.shape[0]

    tile = _choose_tile(B, tile_b)
    B_pad = _round_up(B, tile)

    # Pad 213 -> 256 features and batch -> multiple of tile; cast to bf16.
    # Expressed as jnp.pad so XLA fuses it under jit (no separate HBM pass).
    x_p = jnp.pad(x.astype(jnp.bfloat16),
                  ((0, B_pad - B), (0, STATE_PAD - STATE_SIZE)))

    grid = (B_pad // tile,)

    out = pl.pallas_call(
        dqn_mlp_kernel,
        out_shape=jax.ShapeDtypeStruct((B_pad, OUT_PAD), jnp.float32),
        grid_spec=pltpu.PrefetchScalarGridSpec(
            num_scalar_prefetch=0,
            grid=grid,
            in_specs=[
                # x: tiled along batch
                pl.BlockSpec((tile, STATE_PAD), lambda i: (i, 0)),
                # weights/biases: constant index_map -> VMEM-resident, DMA'd once
                pl.BlockSpec((STATE_PAD, HIDDEN1), lambda i: (0, 0)),
                pl.BlockSpec((1, HIDDEN1), lambda i: (0, 0)),
                pl.BlockSpec((HIDDEN1, HIDDEN2), lambda i: (0, 0)),
                pl.BlockSpec((1, HIDDEN2), lambda i: (0, 0)),
                pl.BlockSpec((HIDDEN2, OUT_PAD), lambda i: (0, 0)),
                pl.BlockSpec((1, OUT_PAD), lambda i: (0, 0)),
            ],
            out_specs=pl.BlockSpec((tile, OUT_PAD), lambda i: (i, 0)),
        ),
        compiler_params=pltpu.CompilerParams(
            dimension_semantics=("parallel",),   # megacore sharding on v7x
            vmem_limit_bytes=24 << 20,           # ample even at tile_b=1024
        ),
    )(x_p, w1, b1, w2, b2, w3, b3)

    # Undo batch and lane padding.
    return out[:B, :ACTION_SIZE]
    # TODO(synk): for tiny-batch serving, keep the ~0.8 MiB of weights
    # VMEM-resident across calls (cross-pallas_call prefetch, pattern P10).
    # TODO(synk): on v7x, experiment with fp8 w1 (per-channel scale folded into
    # b1) to halve fc1's weight DMA/footprint -- needs argmax-stability check.


dqn_forward_jit = jax.jit(dqn_forward, static_argnames=("tile_b",))


def init_linear_params(key, fan_in, fan_out):
    """Match PyTorch nn.Linear default init: U(-1/sqrt(fan_in), 1/sqrt(fan_in))."""
    k_w, k_b = jax.random.split(key)
    bound = 1.0 / jnp.sqrt(jnp.float32(fan_in))
    w = jax.random.uniform(k_w, (fan_in, fan_out), jnp.float32, -bound, bound)
    b = jax.random.uniform(k_b, (1, fan_out), jnp.float32, -bound, bound)
    return w, b


def make_params(key):
    """Logical (unpadded, f32) parameters, layout (in, out) / (1, out)."""
    k1, k2, k3 = jax.random.split(key, 3)
    w1, b1 = init_linear_params(k1, STATE_SIZE, HIDDEN1)
    w2, b2 = init_linear_params(k2, HIDDEN1, HIDDEN2)
    w3, b3 = init_linear_params(k3, HIDDEN2, ACTION_SIZE)
    return (w1, b1, w2, b2, w3, b3)


def make_kernel_params(params):
    """Pad + cast once at parameter-build time: bf16 weights, f32 biases,
    K padded 213->256 for fc1, N padded 2->128 for fc3."""
    w1, b1, w2, b2, w3, b3 = params

    w1_p = jnp.zeros((STATE_PAD, HIDDEN1), jnp.float32).at[:STATE_SIZE, :].set(w1)
    w3_p = jnp.zeros((HIDDEN2, OUT_PAD), jnp.float32).at[:, :ACTION_SIZE].set(w3)
    b3_p = jnp.zeros((1, OUT_PAD), jnp.float32).at[:, :ACTION_SIZE].set(b3)

    return (
        w1_p.astype(jnp.bfloat16), b1,
        w2.astype(jnp.bfloat16), b2,
        w3_p.astype(jnp.bfloat16), b3_p,
    )


def reference_forward_f32(x, params):
    w1, b1, w2, b2, w3, b3 = params
    h1 = jnp.maximum(x @ w1 + b1, 0.0)
    h2 = jnp.maximum(h1 @ w2 + b2, 0.0)
    return h2 @ w3 + b3


def reference_forward_bf16(x, kernel_params):
    """Same arithmetic regime as the kernel (bf16 operands, f32 accumulation)."""
    w1, b1, w2, b2, w3, b3 = kernel_params
    B = x.shape[0]
    xb = jnp.pad(x.astype(jnp.bfloat16), ((0, 0), (0, STATE_PAD - STATE_SIZE)))
    h1 = jnp.maximum(jnp.dot(xb, w1, preferred_element_type=jnp.float32) + b1, 0.0)
    h2 = jnp.maximum(
        jnp.dot(h1.astype(jnp.bfloat16), w2, preferred_element_type=jnp.float32) + b2,
        0.0)
    out = jnp.dot(h2.astype(jnp.bfloat16), w3, preferred_element_type=jnp.float32) + b3
    return out[:, :ACTION_SIZE]


if __name__ == "__main__":
    key = jax.random.PRNGKey(0)
    k_params, k_x1, k_x2 = jax.random.split(key, 3)

    params = make_params(k_params)          # logical f32 params (module semantics)
    kparams = make_kernel_params(params)    # padded bf16 kernel params

    # Tiny-batch serving path: single small tile (B=8 pads to 16 rows, not 128).
    B1 = 8
    x1 = jax.random.normal(k_x1, (B1, STATE_SIZE), jnp.float32)
    out1 = jax.block_until_ready(dqn_forward_jit(x1, kparams))
    assert out1.shape == (B1, ACTION_SIZE)
    assert jnp.allclose(out1, reference_forward_bf16(x1, kparams), atol=5e-3, rtol=5e-3)
    assert jnp.allclose(out1, reference_forward_f32(x1, params), atol=5e-2, rtol=5e-2)

    # Multi-tile batch: exercises grid > 1 (both v7x TensorCores via "parallel").
    B2 = 384
    x2 = jax.random.normal(k_x2, (B2, STATE_SIZE), jnp.float32)
    out2 = jax.block_until_ready(dqn_forward_jit(x2, kparams))
    assert out2.shape == (B2, ACTION_SIZE)
    assert jnp.allclose(out2, reference_forward_bf16(x2, kparams), atol=5e-3, rtol=5e-3)
    assert jnp.allclose(out2, reference_forward_f32(x2, params), atol=5e-2, rtol=5e-2)

    print("KERNEL_OK")
</pallas_src>

<mosaic_0001>
module attributes {stable_mosaic.version = 11 : i64} {
  func.func @dqn_mlp_kernel(%arg0: i32, %arg1: memref<16x256xbf16, #tpu.memory_space<vmem>>, %arg2: memref<256x1024xbf16, #tpu.memory_space<vmem>>, %arg3: memref<1x1024xf32, #tpu.memory_space<vmem>>, %arg4: memref<1024x128xbf16, #tpu.memory_space<vmem>>, %arg5: memref<1x128xf32, #tpu.memory_space<vmem>>, %arg6: memref<128x128xbf16, #tpu.memory_space<vmem>>, %arg7: memref<1x128xf32, #tpu.memory_space<vmem>>, %arg8: memref<16x128xf32, #tpu.memory_space<vmem>>) attributes {dimension_semantics = [#tpu.dimension_semantics<parallel>], iteration_bounds = array<i64: 1>, scalar_prefetch = 0 : i64, scratch_operands = 0 : i64, tpu.core_type = #tpu.core_type<tc>, window_params = [{transform_indices = @transform_0, window_bounds = array<i64: 16, 256>}, {pipeline_mode = #tpu.pipeline_mode<synchronous>, transform_indices = @transform_1, window_bounds = array<i64: 256, 1024>}, {pipeline_mode = #tpu.pipeline_mode<synchronous>, transform_indices = @transform_2, window_bounds = array<i64: 1, 1024>}, {pipeline_mode = #tpu.pipeline_mode<synchronous>, transform_indices = @transform_3, window_bounds = array<i64: 1024, 128>}, {pipeline_mode = #tpu.pipeline_mode<synchronous>, transform_indices = @transform_4, window_bounds = array<i64: 1, 128>}, {pipeline_mode = #tpu.pipeline_mode<synchronous>, transform_indices = @transform_5, window_bounds = array<i64: 128, 128>}, {pipeline_mode = #tpu.pipeline_mode<synchronous>, transform_indices = @transform_6, window_bounds = array<i64: 1, 128>}, {transform_indices = @transform_7, window_bounds = array<i64: 16, 128>}]} {
    %c0 = arith.constant 0 : index
    %c0_0 = arith.constant 0 : index
    %0 = vector.load %arg1[%c0, %c0_0] : memref<16x256xbf16, #tpu.memory_space<vmem>>, vector<16x256xbf16>
    %cst = arith.constant 0.000000e+00 : f32
    %1 = vector.broadcast %cst : f32 to vector<16x128xf32>
    %c0_1 = arith.constant 0 : index
    %c0_2 = arith.constant 0 : index
    %2 = vector.load %arg2[%c0_1, %c0_2] : memref<256x1024xbf16, #tpu.memory_space<vmem>>, vector<256x256xbf16>
    %cst_3 = arith.constant dense<0.000000e+00> : vector<16x256xf32>
    %3 = tpu.matmul %0, %2, %cst_3 {dimension_numbers = #tpu.dot_dimension_numbers<[1], [0], [0], [1], [0, 0, 1, 1], [], []>} : vector<16x256xbf16>, vector<256x256xbf16>, vector<16x256xf32> -> vector<16x256xf32>
    %c0_4 = arith.constant 0 : index
    %c0_5 = arith.constant 0 : index
    %4 = vector.load %arg3[%c0_4, %c0_5] : memref<1x1024xf32, #tpu.memory_space<vmem>>, vector<1x256xf32>
    %5 = vector.broadcast %4 : vector<1x256xf32> to vector<16x256xf32>
    %6 = arith.addf %3, %5 : vector<16x256xf32>
    %cst_6 = arith.constant 0.000000e+00 : f32
    %7 = vector.broadcast %cst_6 : f32 to vector<16x256xf32>
    %8 = arith.maximumf %6, %7 : vector<16x256xf32>
    %9 = arith.truncf %8 : vector<16x256xf32> to vector<16x256xbf16>
    %c0_7 = arith.constant 0 : index
    %c0_8 = arith.constant 0 : index
    %10 = vector.load %arg4[%c0_7, %c0_8] : memref<1024x128xbf16, #tpu.memory_space<vmem>>, vector<256x128xbf16>
    %cst_9 = arith.constant dense<0.000000e+00> : vector<16x128xf32>
    %11 = tpu.matmul %9, %10, %cst_9 {dimension_numbers = #tpu.dot_dimension_numbers<[1], [0], [0], [1], [0, 0, 1, 1], [], []>} : vector<16x256xbf16>, vector<256x128xbf16>, vector<16x128xf32> -> vector<16x128xf32>
    %12 = arith.addf %1, %11 : vector<16x128xf32>
    %c0_10 = arith.constant 0 : index
    %c256 = arith.constant 256 : index
    %13 = vector.load %arg2[%c0_10, %c256] : memref<256x1024xbf16, #tpu.memory_space<vmem>>, vector<256x256xbf16>
    %cst_11 = arith.constant dense<0.000000e+00> : vector<16x256xf32>
    %14 = tpu.matmul %0, %13, %cst_11 {dimension_numbers = #tpu.dot_dimension_numbers<[1], [0], [0], [1], [0, 0, 1, 1], [], []>} : vector<16x256xbf16>, vector<256x256xbf16>, vector<16x256xf32> -> vector<16x256xf32>
    %c0_12 = arith.constant 0 : index
    %c256_13 = arith.constant 256 : index
    %15 = vector.load %arg3[%c0_12, %c256_13] : memref<1x1024xf32, #tpu.memory_space<vmem>>, vector<1x256xf32>
    %16 = vector.broadcast %15 : vector<1x256xf32> to vector<16x256xf32>
    %17 = arith.addf %14, %16 : vector<16x256xf32>
    %cst_14 = arith.constant 0.000000e+00 : f32
    %18 = vector.broadcast %cst_14 : f32 to vector<16x256xf32>
    %19 = arith.maximumf %17, %18 : vector<16x256xf32>
    %20 = arith.truncf %19 : vector<16x256xf32> to vector<16x256xbf16>
    %c256_15 = arith.constant 256 : index
    %c0_16 = arith.constant 0 : index
    %21 = vector.load %arg4[%c256_15, %c0_16] : memref<1024x128xbf16, #tpu.memory_space<vmem>>, vector<256x128xbf16>
    %cst_17 = arith.constant dense<0.000000e+00> : vector<16x128xf32>
    %22 = tpu.matmul %20, %21, %cst_17 {dimension_numbers = #tpu.dot_dimension_numbers<[1], [0], [0], [1], [0, 0, 1, 1], [], []>} : vector<16x256xbf16>, vector<256x128xbf16>, vector<16x128xf32> -> vector<16x128xf32>
    %23 = arith.addf %12, %22 : vector<16x128xf32>
    %c0_18 = arith.constant 0 : index
    %c512 = arith.constant 512 : index
    %24 = vector.load %arg2[%c0_18, %c512] : memref<256x1024xbf16, #tpu.memory_space<vmem>>, vector<256x256xbf16>
    %cst_19 = arith.constant dense<0.000000e+00> : vector<16x256xf32>
    %25 = tpu.matmul %0, %24, %cst_19 {dimension_numbers = #tpu.dot_dimension_numbers<[1], [0], [0], [1], [0, 0, 1, 1], [], []>} : vector<16x256xbf16>, vector<256x256xbf16>, vector<16x256xf32> -> vector<16x256xf32>
    %c0_20 = arith.constant 0 : index
    %c512_21 = arith.constant 512 : index
    %26 = vector.load %arg3[%c0_20, %c512_21] : memref<1x1024xf32, #tpu.memory_space<vmem>>, vector<1x256xf32>
    %27 = vector.broadcast %26 : vector<1x256xf32> to vector<16x256xf32>
    %28 = arith.addf %25, %27 : vector<16x256xf32>
    %cst_22 = arith.constant 0.000000e+00 : f32
    %29 = vector.broadcast %cst_22 : f32 to vector<16x256xf32>
    %30 = arith.maximumf %28, %29 : vector<16x256xf32>
    %31 = arith.truncf %30 : vector<16x256xf32> to vector<16x256xbf16>
    %c512_23 = arith.constant 512 : index
    %c0_24 = arith.constant 0 : index
    %32 = vector.load %arg4[%c512_23, %c0_24] : memref<1024x128xbf16, #tpu.memory_space<vmem>>, vector<256x128xbf16>
    %cst_25 = arith.constant dense<0.000000e+00> : vector<16x128xf32>
    %33 = tpu.matmul %31, %32, %cst_25 {dimension_numbers = #tpu.dot_dimension_numbers<[1], [0], [0], [1], [0, 0, 1, 1], [], []>} : vector<16x256xbf16>, vector<256x128xbf16>, vector<16x128xf32> -> vector<16x128xf32>
    %34 = arith.addf %23, %33 : vector<16x128xf32>
    %c0_26 = arith.constant 0 : index
    %c768 = arith.constant 768 : index
    %35 = vector.load %arg2[%c0_26, %c768] : memref<256x1024xbf16, #tpu.memory_space<vmem>>, vector<256x256xbf16>
    %cst_27 = arith.constant dense<0.000000e+00> : vector<16x256xf32>
    %36 = tpu.matmul %0, %35, %cst_27 {dimension_numbers = #tpu.dot_dimension_numbers<[1], [0], [0], [1], [0, 0, 1, 1], [], []>} : vector<16x256xbf16>, vector<256x256xbf16>, vector<16x256xf32> -> vector<16x256xf32>
    %c0_28 = arith.constant 0 : index
    %c768_29 = arith.constant 768 : index
    %37 = vector.load %arg3[%c0_28, %c768_29] : memref<1x1024xf32, #tpu.memory_space<vmem>>, vector<1x256xf32>
    %38 = vector.broadcast %37 : vector<1x256xf32> to vector<16x256xf32>
    %39 = arith.addf %36, %38 : vector<16x256xf32>
    %cst_30 = arith.constant 0.000000e+00 : f32
    %40 = vector.broadcast %cst_30 : f32 to vector<16x256xf32>
    %41 = arith.maximumf %39, %40 : vector<16x256xf32>
    %42 = arith.truncf %41 : vector<16x256xf32> to vector<16x256xbf16>
    %c768_31 = arith.constant 768 : index
    %c0_32 = arith.constant 0 : index
    %43 = vector.load %arg4[%c768_31, %c0_32] : memref<1024x128xbf16, #tpu.memory_space<vmem>>, vector<256x128xbf16>
    %cst_33 = arith.constant dense<0.000000e+00> : vector<16x128xf32>
    %44 = tpu.matmul %42, %43, %cst_33 {dimension_numbers = #tpu.dot_dimension_numbers<[1], [0], [0], [1], [0, 0, 1, 1], [], []>} : vector<16x256xbf16>, vector<256x128xbf16>, vector<16x128xf32> -> vector<16x128xf32>
    %45 = arith.addf %34, %44 : vector<16x128xf32>
    %c0_34 = arith.constant 0 : index
    %c0_35 = arith.constant 0 : index
    %46 = vector.load %arg5[%c0_34, %c0_35] : memref<1x128xf32, #tpu.memory_space<vmem>>, vector<1x128xf32>
    %47 = vector.broadcast %46 : vector<1x128xf32> to vector<16x128xf32>
    %48 = arith.addf %45, %47 : vector<16x128xf32>
    %cst_36 = arith.constant 0.000000e+00 : f32
    %49 = vector.broadcast %cst_36 : f32 to vector<16x128xf32>
    %50 = arith.maximumf %48, %49 : vector<16x128xf32>
    %51 = arith.truncf %50 : vector<16x128xf32> to vector<16x128xbf16>
    %c0_37 = arith.constant 0 : index
    %c0_38 = arith.constant 0 : index
    %52 = vector.load %arg6[%c0_37, %c0_38] : memref<128x128xbf16, #tpu.memory_space<vmem>>, vector<128x128xbf16>
    %cst_39 = arith.constant dense<0.000000e+00> : vector<16x128xf32>
    %53 = tpu.matmul %51, %52, %cst_39 {dimension_numbers = #tpu.dot_dimension_numbers<[1], [0], [0], [1], [0, 0, 1, 1], [], []>} : vector<16x128xbf16>, vector<128x128xbf16>, vector<16x128xf32> -> vector<16x128xf32>
    %c0_40 = arith.constant 0 : index
    %c0_41 = arith.constant 0 : index
    %54 = vector.load %arg7[%c0_40, %c0_41] : memref<1x128xf32, #tpu.memory_space<vmem>>, vector<1x128xf32>
    %55 = vector.broadcast %54 : vector<1x128xf32> to vector<16x128xf32>
    %56 = arith.addf %53, %55 : vector<16x128xf32>
    %c0_42 = arith.constant 0 : index
    %c0_43 = arith.constant 0 : index
    %57 = vector.load %arg8[%c0_42, %c0_43] : memref<16x128xf32, #tpu.memory_space<vmem>>, vector<16x128xf32>
    tpu.vector_store %arg8[%c0_42, %c0_43], %56 {strides = array<i32>} : memref<16x128xf32, #tpu.memory_space<vmem>>, vector<16x128xf32>,
    return
  }
  func.func @transform_0(%arg0: i32) -> (i32, i32) {
    %c0_i32 = arith.constant 0 : i32
    %c0_i32_0 = arith.constant 0 : i32
    return %arg0, %c0_i32 : i32, i32
  }
  func.func @transform_1(%arg0: i32) -> (i32, i32) {
    %c0_i32 = arith.constant 0 : i32
    %c0_i32_0 = arith.constant 0 : i32
    %c0_i32_1 = arith.constant 0 : i32
    return %c0_i32, %c0_i32_0 : i32, i32
  }
  func.func @transform_2(%arg0: i32) -> (i32, i32) {
    %c0_i32 = arith.constant 0 : i32
    %c0_i32_0 = arith.constant 0 : i32
    %c0_i32_1 = arith.constant 0 : i32
    return %c0_i32, %c0_i32_0 : i32, i32
  }
  func.func @transform_3(%arg0: i32) -> (i32, i32) {
    %c0_i32 = arith.constant 0 : i32
    %c0_i32_0 = arith.constant 0 : i32
    %c0_i32_1 = arith.constant 0 : i32
    return %c0_i32, %c0_i32_0 : i32, i32
  }
  func.func @transform_4(%arg0: i32) -> (i32, i32) {
    %c0_i32 = arith.constant 0 : i32
    %c0_i32_0 = arith.constant 0 : i32
    %c0_i32_1 = arith.constant 0 : i32
    return %c0_i32, %c0_i32_0 : i32, i32
  }
  func.func @transform_5(%arg0: i32) -> (i32, i32) {
    %c0_i32 = arith.constant 0 : i32
    %c0_i32_0 = arith.constant 0 : i32
    %c0_i32_1 = arith.constant 0 : i32
    return %c0_i32, %c0_i32_0 : i32, i32
  }
  func.func @transform_6(%arg0: i32) -> (i32, i32) {
    %c0_i32 = arith.constant 0 : i32
    %c0_i32_0 = arith.constant 0 : i32
    %c0_i32_1 = arith.constant 0 : i32
    return %c0_i32, %c0_i32_0 : i32, i32
  }
  func.func @transform_7(%arg0: i32) -> (i32, i32) {
    %c0_i32 = arith.constant 0 : i32
    %c0_i32_0 = arith.constant 0 : i32
    return %arg0, %c0_i32 : i32, i32
  }
}

</mosaic_0001>

<llo_original>
// kernel: dqn_forward.1
$region0: #{dqn_forward.1}
  #allocation0 [shape = 'u32[]', space=smem, size = 0x4, offset = 0x4, fixed_abs, tag = 'smem constant byte address 0x4 - core index']
  #allocation1 [shape = 'u32[144,128]{1,0:T(1,128)}', space=vmem, size = 0x12000, scoped, tag = 'internal scratch']
  %s0 = inlined_call_operand.vmem [shape: bf16[16,256], index: 0, kind: input, shape index: {}]
  %s1 = inlined_call_operand.hbm [shape: bf16[256,1024], index: 1, kind: input, shape index: {}]
  %s2 = inlined_call_operand.hbm [shape: f32[1,1024], index: 2, kind: input, shape index: {}]
  %s3 = inlined_call_operand.hbm [shape: bf16[1024,128], index: 3, kind: input, shape index: {}]
  %s4 = inlined_call_operand.vmem [shape: f32[1,128], index: 4, kind: input, shape index: {}]
  %s5 = inlined_call_operand.vmem [shape: bf16[128,128], index: 5, kind: input, shape index: {}]
  %s6 = inlined_call_operand.vmem [shape: f32[1,128], index: 6, kind: input, shape index: {}]
  %s7 = inlined_call_operand.vmem [shape: f32[16,128], index: 7, kind: output, shape index: {}]
  %s8 = sld [smem:[#allocation0]]
  $region50: #{dqn_forward.1} parent=0
    _
  %s10 = ssub.s32 1, %s8
  %s11 = scalar_select 0, %s10, %s8
  $region1: #{dqn_forward.1} parent=0
    #allocation2 [shape = 'u8[524288]{0}', space=vmem, size = 0x80000, scoped, tag = 'input window, operand 1, single buffered']
    #allocation3 [shape = 's32[1]{0}', space=sflag, size = 0x4, scoped, tag = 'scoped memory for dqn_forward.1']
    #allocation4 [shape = 'u8[4096]{0}', space=vmem, size = 0x1000, scoped, tag = 'input window, operand 2, single buffered']
    #allocation5 [shape = 's32[1]{0}', space=sflag, size = 0x4, scoped, tag = 'scoped memory for dqn_forward.1']
    #allocation6 [shape = 'u8[262144]{0}', space=vmem, size = 0x40000, scoped, tag = 'input window, operand 3, single buffered']
    %12 = vsyncpa [#allocation3], 0
    %13 = vsyncpa [#allocation5], 0
    // Predicated region
    $region2: #{dqn_forward.1} parent=1 // pred_check
      _
    $region3: #{dqn_forward.1} parent=1 // pred_check_branch
      %15 = sbr.rel (0) target = $region5
    $region4: #{dqn_forward.1} parent=1 // pred_region
      _
    $region5: #{dqn_forward.1} parent=1 // pred_fallthru
      _
    // Predicated region
    $region6: #{dqn_forward.1} parent=1 // pred_check
      _
    $region7: #{dqn_forward.1} parent=1 // pred_check_branch
      %17 = sbr.rel (0) target = $region9
    $region8: #{dqn_forward.1} parent=1 // pred_region
      %s19 = ssub.s32 16384, 16384
      %20 = vsyncadd [#allocation3], %s19
      %s21 = sshll.u32 [#allocation2], 4
      %s22 = int_to_ptr.vmem [resolvable:$true] %s21
      %27 = dma.hbm_to_vmem [thread:$0]  %s1, 16384, %s22, [#allocation3], 512, 512, 32
    $region9: #{dqn_forward.1} parent=1 // pred_fallthru
      _
    // Predicated region
    $region10: #{dqn_forward.1} parent=1 // pred_check
      _
    $region11: #{dqn_forward.1} parent=1 // pred_check_branch
      %29 = sbr.rel (0) target = $region13
    $region12: #{dqn_forward.1} parent=1 // pred_region
      %s31 = ssub.s32 128, 128
      %32 = vsyncadd [#allocation5], %s31
      %s34 = sshll.u32 [#allocation4], 4
      %s35 = int_to_ptr.vmem [resolvable:$true] %s34
      %37 = dma.hbm_to_vmem [thread:$0]  %s2, 128, %s35, [#allocation5]
    $region13: #{dqn_forward.1} parent=1 // pred_fallthru
      _
    // Predicated region
    $region14: #{dqn_forward.1} parent=1 // pred_check
      _
    $region15: #{dqn_forward.1} parent=1 // pred_check_branch
      %39 = sbr.rel (0) target = $region17
    $region16: #{dqn_forward.1} parent=1 // pred_region
      %s41 = ssub.s32 8192, 8192
      %42 = vsyncadd [#allocation5], %s41
      %s43 = sshll.u32 [#allocation6], 4
      %s44 = int_to_ptr.vmem [resolvable:$true] %s43
      %49 = dma.hbm_to_vmem [thread:$0]  %s3, 8192, %s44, [#allocation5], 64, 64, 4
    $region17: #{dqn_forward.1} parent=1 // pred_fallthru
      _
    // Predicated region
    $region18: #{dqn_forward.1} parent=1 // pred_check
      _
    $region19: #{dqn_forward.1} parent=1 // pred_check_branch
      %51 = sbr.rel (0) target = $region21
    $region20: #{dqn_forward.1} parent=1 // pred_region
      _
    $region21: #{dqn_forward.1} parent=1 // pred_fallthru
      _
    // Predicated region
    $region22: #{dqn_forward.1} parent=1 // pred_check
      _
    $region23: #{dqn_forward.1} parent=1 // pred_check_branch
      %53 = sbr.rel (0) target = $region25
    $region24: #{dqn_forward.1} parent=1 // pred_region
      _
    $region25: #{dqn_forward.1} parent=1 // pred_fallthru
      _
    // Predicated region
    $region26: #{dqn_forward.1} parent=1 // pred_check
      _
    $region27: #{dqn_forward.1} parent=1 // pred_check_branch
      %55 = sbr.rel (0) target = $region29
    $region28: #{dqn_forward.1} parent=1 // pred_region
      _
    $region29: #{dqn_forward.1} parent=1 // pred_fallthru
      _
    // Predicated region
    $region30: #{dqn_forward.1} parent=1 // pred_check
      _
    $region31: #{dqn_forward.1} parent=1 // pred_check_branch
      %57 = sbr.rel (0) target = $region33
    $region32: #{dqn_forward.1} parent=1 // pred_region
      %58 = dma.done [#allocation3], 16384
    $region33: #{dqn_forward.1} parent=1 // pred_fallthru
      _
    // Predicated region
    $region34: #{dqn_forward.1} parent=1 // pred_check
      _
    $region35: #{dqn_forward.1} parent=1 // pred_check_branch
      %60 = sbr.rel (0) target = $region37
    $region36: #{dqn_forward.1} parent=1 // pred_region
      %61 = dma.done [#allocation5], 128
    $region37: #{dqn_forward.1} parent=1 // pred_fallthru
      _
    // Predicated region
    $region38: #{dqn_forward.1} parent=1 // pred_check
      _
    $region39: #{dqn_forward.1} parent=1 // pred_check_branch
      %63 = sbr.rel (0) target = $region41
    $region40: #{dqn_forward.1} parent=1 // pred_region
      %64 = dma.done [#allocation5], 8192
    $region41: #{dqn_forward.1} parent=1 // pred_fallthru
      _
    %v66 = vld [vmem:[%s0] sm:$0xff]
    %v67 = vld [vmem:[%s0 + $0x8] sm:$0xff]
    %v68 = vld [vmem:[#allocation2] sm:$0xff]
    %v69 = vld [vmem:[#allocation2 + $0x20] sm:$0xff]
    %v70 = vld [vmem:[#allocation2 + $0x40] sm:$0xff]
    %v71 = vld [vmem:[#allocation2 + $0x60] sm:$0xff]
    %v72 = vld [vmem:[#allocation2 + $0x80] sm:$0xff]
    %v73 = vld [vmem:[#allocation2 + $0xa0] sm:$0xff]
    %v74 = vld [vmem:[#allocation2 + $0xc0] sm:$0xff]
    %v75 = vld [vmem:[#allocation2 + $0xe0] sm:$0xff]
    %v76 = vld [vmem:[#allocation2 + $0x100] sm:$0xff]
    %v77 = vld [vmem:[#allocation2 + $0x120] sm:$0xff]
    %v78 = vld [vmem:[#allocation2 + $0x140] sm:$0xff]
    %v79 = vld [vmem:[#allocation2 + $0x160] sm:$0xff]
    %v80 = vld [vmem:[#allocation2 + $0x180] sm:$0xff]
    %v81 = vld [vmem:[#allocation2 + $0x1a0] sm:$0xff]
    %v82 = vld [vmem:[#allocation2 + $0x1c0] sm:$0xff]
    %v83 = vld [vmem:[#allocation2 + $0x1e0] sm:$0xff]
    %v84 = vld [vmem:[#allocation2 + $0x200] sm:$0xff]
    %v85 = vld [vmem:[#allocation2 + $0x220] sm:$0xff]
    %v86 = vld [vmem:[#allocation2 + $0x240] sm:$0xff]
    %v87 = vld [vmem:[#allocation2 + $0x260] sm:$0xff]
    %v88 = vld [vmem:[#allocation2 + $0x280] sm:$0xff]
    %v89 = vld [vmem:[#allocation2 + $0x2a0] sm:$0xff]
    %v90 = vld [vmem:[#allocation2 + $0x2c0] sm:$0xff]
    %v91 = vld [vmem:[#allocation2 + $0x2e0] sm:$0xff]
    %v92 = vld [vmem:[#allocation2 + $0x300] sm:$0xff]
    %v93 = vld [vmem:[#allocation2 + $0x320] sm:$0xff]
    %v94 = vld [vmem:[#allocation2 + $0x340] sm:$0xff]
    %v95 = vld [vmem:[#allocation2 + $0x360] sm:$0xff]
    %v96 = vld [vmem:[#allocation2 + $0x380] sm:$0xff]
    %v97 = vld [vmem:[#allocation2 + $0x3a0] sm:$0xff]
    %v98 = vld [vmem:[#allocation2 + $0x3c0] sm:$0xff]
    %v99 = vld [vmem:[#allocation2 + $0x3e0] sm:$0xff]
    %v100 = vld [vmem:[#allocation4] sm:$0x3]
    %v102 = vlaneseq
    %v103 = vshrl.u32 %v102, 7
    %v104 = vsub.s32 0, %v103
    %v105 = vrot.slane %v100, %v104
    %v106 = vlaneseq
    %v107 = vshrl.u32 %v106, 7
    %v108 = vsub.s32 1, %v107
    %v109 = vrot.slane %v100, %v108
    %v114 = vunpack.c.l.b16 %v66
    %v115 = vunpack.c.h.b16 %v66
    %v116 = vunpack.c.l.b16 %v67
    %v117 = vunpack.c.h.b16 %v67
    %v118 = vpack.c.b16 %v116, %v114
    %v119 = vpack.c.b16 %v117, %v115
    %v154 = vunpack.c.l.b16 %v68
    %v155 = vunpack.c.h.b16 %v68
    %v156 = vunpack.c.l.b16 %v69
    %v157 = vunpack.c.h.b16 %v69
    %v158 = vunpack.c.l.b16 %v70
    %v159 = vunpack.c.h.b16 %v70
    %v160 = vunpack.c.l.b16 %v71
    %v161 = vunpack.c.h.b16 %v71
    %v162 = vunpack.c.l.b16 %v72
    %v163 = vunpack.c.h.b16 %v72
    %v164 = vunpack.c.l.b16 %v73
    %v165 = vunpack.c.h.b16 %v73
    %v166 = vunpack.c.l.b16 %v74
    %v167 = vunpack.c.h.b16 %v74
    %v168 = vunpack.c.l.b16 %v75
    %v169 = vunpack.c.h.b16 %v75
    %v170 = vunpack.c.l.b16 %v76
    %v171 = vunpack.c.h.b16 %v76
    %v172 = vunpack.c.l.b16 %v77
    %v173 = vunpack.c.h.b16 %v77
    %v174 = vunpack.c.l.b16 %v78
    %v175 = vunpack.c.h.b16 %v78
    %v176 = vunpack.c.l.b16 %v79
    %v177 = vunpack.c.h.b16 %v79
    %v178 = vunpack.c.l.b16 %v80
    %v179 = vunpack.c.h.b16 %v80
    %v180 = vunpack.c.l.b16 %v81
    %v181 = vunpack.c.h.b16 %v81
    %v182 = vunpack.c.l.b16 %v82
    %v183 = vunpack.c.h.b16 %v82
    %v184 = vunpack.c.l.b16 %v83
    %v185 = vunpack.c.h.b16 %v83
    %v186 = vunpack.c.l.b16 %v84
    %v187 = vunpack.c.h.b16 %v84
    %v188 = vunpack.c.l.b16 %v85
    %v189 = vunpack.c.h.b16 %v85
    %v190 = vunpack.c.l.b16 %v86
    %v191 = vunpack.c.h.b16 %v86
    %v192 = vunpack.c.l.b16 %v87
    %v193 = vunpack.c.h.b16 %v87
    %v194 = vunpack.c.l.b16 %v88
    %v195 = vunpack.c.h.b16 %v88
    %v196 = vunpack.c.l.b16 %v89
    %v197 = vunpack.c.h.b16 %v89
    %v198 = vunpack.c.l.b16 %v90
    %v199 = vunpack.c.h.b16 %v90
    %v200 = vunpack.c.l.b16 %v91
    %v201 = vunpack.c.h.b16 %v91
    %v202 = vunpack.c.l.b16 %v92
    %v203 = vunpack.c.h.b16 %v92
    %v204 = vunpack.c.l.b16 %v93
    %v205 = vunpack.c.h.b16 %v93
    %v206 = vunpack.c.l.b16 %v94
    %v207 = vunpack.c.h.b16 %v94
    %v208 = vunpack.c.l.b16 %v95
    %v209 = vunpack.c.h.b16 %v95
    %v210 = vunpack.c.l.b16 %v96
    %v211 = vunpack.c.h.b16 %v96
    %v212 = vunpack.c.l.b16 %v97
    %v213 = vunpack.c.h.b16 %v97
    %v214 = vunpack.c.l.b16 %v98
    %v215 = vunpack.c.h.b16 %v98
    %v216 = vunpack.c.l.b16 %v99
    %v217 = vunpack.c.h.b16 %v99
    %v218 = vpack.c.b16 %v156, %v154
    %v219 = vpack.c.b16 %v157, %v155
    %v220 = vpack.c.b16 %v160, %v158
    %v221 = vpack.c.b16 %v161, %v159
    %v222 = vpack.c.b16 %v164, %v162
    %v223 = vpack.c.b16 %v165, %v163
    %v224 = vpack.c.b16 %v168, %v166
    %v225 = vpack.c.b16 %v169, %v167
    %v226 = vpack.c.b16 %v172, %v170
    %v227 = vpack.c.b16 %v173, %v171
    %v228 = vpack.c.b16 %v176, %v174
    %v229 = vpack.c.b16 %v177, %v175
    %v230 = vpack.c.b16 %v180, %v178
    %v231 = vpack.c.b16 %v181, %v179
    %v232 = vpack.c.b16 %v184, %v182
    %v233 = vpack.c.b16 %v185, %v183
    %v234 = vpack.c.b16 %v188, %v186
    %v235 = vpack.c.b16 %v189, %v187
    %v236 = vpack.c.b16 %v192, %v190
    %v237 = vpack.c.b16 %v193, %v191
    %v238 = vpack.c.b16 %v196, %v194
    %v239 = vpack.c.b16 %v197, %v195
    %v240 = vpack.c.b16 %v200, %v198
    %v241 = vpack.c.b16 %v201, %v199
    %v242 = vpack.c.b16 %v204, %v202
    %v243 = vpack.c.b16 %v205, %v203
    %v244 = vpack.c.b16 %v208, %v206
    %v245 = vpack.c.b16 %v209, %v207
    %v246 = vpack.c.b16 %v212, %v210
    %v247 = vpack.c.b16 %v213, %v211
    %v248 = vpack.c.b16 %v216, %v214
    %v249 = vpack.c.b16 %v217, %v215
    %282 = vmatprep.subr.bf16.mxu0 %v219
    %283 = vmatpush1.bf16.msra.mxu0 %v218
    %284 = vmatprep.subr.bf16.mxu0 %v221
    %285 = vmatpush1.bf16.msra.mxu0 %v220
    %286 = vmatprep.subr.bf16.mxu0 %v223
    %287 = vmatpush1.bf16.msra.mxu0 %v222
    %288 = vmatprep.subr.bf16.mxu0 %v225
    %289 = vmatpush1.bf16.msra.mxu0 %v224
    %290 = vmatprep.subr.bf16.mxu0 %v227
    %291 = vmatpush1.bf16.msra.mxu0 %v226
    %292 = vmatprep.subr.bf16.mxu0 %v229
    %293 = vmatpush1.bf16.msra.mxu0 %v228
    %294 = vmatprep.subr.bf16.mxu0 %v231
    %295 = vmatpush1.bf16.msra.mxu0 %v230
    %296 = vmatprep.subr.bf16.mxu0 %v233
    %297 = vmatpush1.bf16.msra.mxu0 %v232
    %298 = vmatprep.subr.bf16.mxu0 %v235
    %299 = vmatpush1.bf16.msra.mxu0 %v234
    %300 = vmatprep.subr.bf16.mxu0 %v237
    %301 = vmatpush1.bf16.msra.mxu0 %v236
    %302 = vmatprep.subr.bf16.mxu0 %v239
    %303 = vmatpush1.bf16.msra.mxu0 %v238
    %304 = vmatprep.subr.bf16.mxu0 %v241
    %305 = vmatpush1.bf16.msra.mxu0 %v240
    %306 = vmatprep.subr.bf16.mxu0 %v243
    %307 = vmatpush1.bf16.msra.mxu0 %v242
    %308 = vmatprep.subr.bf16.mxu0 %v245
    %309 = vmatpush1.bf16.msra.mxu0 %v244
    %310 = vmatprep.subr.bf16.mxu0 %v247
    %311 = vmatpush1.bf16.msra.mxu0 %v246
    %312 = vmatprep.subr.bf16.mxu0 %v249
    %313 = vmatpush1.bf16.msra.mxu0 %v248
    %314 = vmatprep.mubr.bf16.mxu0 %v119
    %315 = vmatmul.mubr.bf16.gmra.mrb[0].mxu0 %v118
    %v316 = vpop.f32.mrb[0].mxu0
    %v317 = vadd.f32 %v105, %v316
    %v318 = vpop.f32.mrb[0].mxu0
    %v319 = vadd.f32 %v109, %v318
    %v320 = vpop.f32.mrb[0].mxu0
    %v321 = vadd.f32 %v105, %v320
    %v322 = vpop.f32.mrb[0].mxu0
    %v323 = vadd.f32 %v109, %v322
    %324 = vdwg.mxu0
    %v325 = vmax.f32 %v317, 0.0
    %v326 = vmax.f32 %v319, 0.0
    %v327 = vmax.f32 %v321, 0.0
    %v328 = vmax.f32 %v323, 0.0
    %v329 = vpack.c.bf16 %v327, %v325
    %v330 = vpack.c.bf16 %v328, %v326
    %v331 = vld [vmem:[#allocation6] sm:$0xf]
    %v332 = vld [vmem:[#allocation6 + $0x4] sm:$0xf]
    %v333 = vld [vmem:[#allocation6 + $0x8] sm:$0xf]
    %v334 = vld [vmem:[#allocation6 + $0xc] sm:$0xf]
    %v335 = vld [vmem:[#allocation6 + $0x10] sm:$0xf]
    %v336 = vld [vmem:[#allocation6 + $0x14] sm:$0xf]
    %v337 = vld [vmem:[#allocation6 + $0x18] sm:$0xf]
    %v338 = vld [vmem:[#allocation6 + $0x1c] sm:$0xf]
    %v339 = vld [vmem:[#allocation6 + $0x20] sm:$0xf]
    %v340 = vld [vmem:[#allocation6 + $0x24] sm:$0xf]
    %v341 = vld [vmem:[#allocation6 + $0x28] sm:$0xf]
    %v342 = vld [vmem:[#allocation6 + $0x2c] sm:$0xf]
    %v343 = vld [vmem:[#allocation6 + $0x30] sm:$0xf]
    %v344 = vld [vmem:[#allocation6 + $0x34] sm:$0xf]
    %v345 = vld [vmem:[#allocation6 + $0x38] sm:$0xf]
    %v346 = vld [vmem:[#allocation6 + $0x3c] sm:$0xf]
    %v347 = vld [vmem:[#allocation6 + $0x40] sm:$0xf]
    %v348 = vld [vmem:[#allocation6 + $0x44] sm:$0xf]
    %v349 = vld [vmem:[#allocation6 + $0x48] sm:$0xf]
    %v350 = vld [vmem:[#allocation6 + $0x4c] sm:$0xf]
    %v351 = vld [vmem:[#allocation6 + $0x50] sm:$0xf]
    %v352 = vld [vmem:[#allocation6 + $0x54] sm:$0xf]
    %v353 = vld [vmem:[#allocation6 + $0x58] sm:$0xf]
    %v354 = vld [vmem:[#allocation6 + $0x5c] sm:$0xf]
    %v355 = vld [vmem:[#allocation6 + $0x60] sm:$0xf]
    %v356 = vld [vmem:[#allocation6 + $0x64] sm:$0xf]
    %v357 = vld [vmem:[#allocation6 + $0x68] sm:$0xf]
    %v358 = vld [vmem:[#allocation6 + $0x6c] sm:$0xf]
    %v359 = vld [vmem:[#allocation6 + $0x70] sm:$0xf]
    %v360 = vld [vmem:[#allocation6 + $0x74] sm:$0xf]
    %v361 = vld [vmem:[#allocation6 + $0x78] sm:$0xf]
    %v362 = vld [vmem:[#allocation6 + $0x7c] sm:$0xf]
    %v363 = vld [vmem:[#allocation2 + $0x8] sm:$0xff]
    %v364 = vld [vmem:[#allocation2 + $0x28] sm:$0xff]
    %v365 = vld [vmem:[#allocation2 + $0x48] sm:$0xff]
    %v366 = vld [vmem:[#allocation2 + $0x68] sm:$0xff]
    %v367 = vld [vmem:[#allocation2 + $0x88] sm:$0xff]
    %v368 = vld [vmem:[#allocation2 + $0xa8] sm:$0xff]
    %v369 = vld [vmem:[#allocation2 + $0xc8] sm:$0xff]
    %v370 = vld [vmem:[#allocation2 + $0xe8] sm:$0xff]
    %v371 = vld [vmem:[#allocation2 + $0x108] sm:$0xff]
    %v372 = vld [vmem:[#allocation2 + $0x128] sm:$0xff]
    %v373 = vld [vmem:[#allocation2 + $0x148] sm:$0xff]
    %v374 = vld [vmem:[#allocation2 + $0x168] sm:$0xff]
    %v375 = vld [vmem:[#allocation2 + $0x188] sm:$0xff]
    %v376 = vld [vmem:[#allocation2 + $0x1a8] sm:$0xff]
    %v377 = vld [vmem:[#allocation2 + $0x1c8] sm:$0xff]
    %v378 = vld [vmem:[#allocation2 + $0x1e8] sm:$0xff]
    %v379 = vld [vmem:[#allocation2 + $0x208] sm:$0xff]
    %v380 = vld [vmem:[#allocation2 + $0x228] sm:$0xff]
    %v381 = vld [vmem:[#allocation2 + $0x248] sm:$0xff]
    %v382 = vld [vmem:[#allocation2 + $0x268] sm:$0xff]
    %v383 = vld [vmem:[#allocation2 + $0x288] sm:$0xff]
    %v384 = vld [vmem:[#allocation2 + $0x2a8] sm:$0xff]
    %v385 = vld [vmem:[#allocation2 + $0x2c8] sm:$0xff]
    %v386 = vld [vmem:[#allocation2 + $0x2e8] sm:$0xff]
    %v387 = vld [vmem:[#allocation2 + $0x308] sm:$0xff]
    %v388 = vld [vmem:[#allocation2 + $0x328] sm:$0xff]
    %v389 = vld [vmem:[#allocation2 + $0x348] sm:$0xff]
    %v390 = vld [vmem:[#allocation2 + $0x368] sm:$0xff]
    %v391 = vld [vmem:[#allocation2 + $0x388] sm:$0xff]
    %v392 = vld [vmem:[#allocation2 + $0x3a8] sm:$0xff]
    %v393 = vld [vmem:[#allocation2 + $0x3c8] sm:$0xff]
    %v394 = vld [vmem:[#allocation2 + $0x3e8] sm:$0xff]
    %v395 = vld [vmem:[#allocation4 + $0x2] sm:$0x3]
    %v397 = vlaneseq
    %v398 = vshrl.u32 %v397, 7
    %v399 = vsub.s32 0, %v398
    %v400 = vrot.slane %v395, %v399
    %v401 = vlaneseq
    %v402 = vshrl.u32 %v401, 7
    %v403 = vsub.s32 1, %v402
    %v404 = vrot.slane %v395, %v403
    %v439 = vunpack.c.l.b16 %v363
    %v440 = vunpack.c.h.b16 %v363
    %v441 = vunpack.c.l.b16 %v364
    %v442 = vunpack.c.h.b16 %v364
    %v443 = vunpack.c.l.b16 %v365
    %v444 = vunpack.c.h.b16 %v365
    %v445 = vunpack.c.l.b16 %v366
    %v446 = vunpack.c.h.b16 %v366
    %v447 = vunpack.c.l.b16 %v367
    %v448 = vunpack.c.h.b16 %v367
    %v449 = vunpack.c.l.b16 %v368
    %v450 = vunpack.c.h.b16 %v368
    %v451 = vunpack.c.l.b16 %v369
    %v452 = vunpack.c.h.b16 %v369
    %v453 = vunpack.c.l.b16 %v370
    %v454 = vunpack.c.h.b16 %v370
    %v455 = vunpack.c.l.b16 %v371
    %v456 = vunpack.c.h.b16 %v371
    %v457 = vunpack.c.l.b16 %v372
    %v458 = vunpack.c.h.b16 %v372
    %v459 = vunpack.c.l.b16 %v373
    %v460 = vunpack.c.h.b16 %v373
    %v461 = vunpack.c.l.b16 %v374
    %v462 = vunpack.c.h.b16 %v374
    %v463 = vunpack.c.l.b16 %v375
    %v464 = vunpack.c.h.b16 %v375
    %v465 = vunpack.c.l.b16 %v376
    %v466 = vunpack.c.h.b16 %v376
    %v467 = vunpack.c.l.b16 %v377
    %v468 = vunpack.c.h.b16 %v377
    %v469 = vunpack.c.l.b16 %v378
    %v470 = vunpack.c.h.b16 %v378
    %v471 = vunpack.c.l.b16 %v379
    %v472 = vunpack.c.h.b16 %v379
    %v473 = vunpack.c.l.b16 %v380
    %v474 = vunpack.c.h.b16 %v380
    %v475 = vunpack.c.l.b16 %v381
    %v476 = vunpack.c.h.b16 %v381
    %v477 = vunpack.c.l.b16 %v382
    %v478 = vunpack.c.h.b16 %v382
    %v479 = vunpack.c.l.b16 %v383
    %v480 = vunpack.c.h.b16 %v383
    %v481 = vunpack.c.l.b16 %v384
    %v482 = vunpack.c.h.b16 %v384
    %v483 = vunpack.c.l.b16 %v385
    %v484 = vunpack.c.h.b16 %v385
    %v485 = vunpack.c.l.b16 %v386
    %v486 = vunpack.c.h.b16 %v386
    %v487 = vunpack.c.l.b16 %v387
    %v488 = vunpack.c.h.b16 %v387
    %v489 = vunpack.c.l.b16 %v388
    %v490 = vunpack.c.h.b16 %v388
    %v491 = vunpack.c.l.b16 %v389
    %v492 = vunpack.c.h.b16 %v389
    %v493 = vunpack.c.l.b16 %v390
    %v494 = vunpack.c.h.b16 %v390
    %v495 = vunpack.c.l.b16 %v391
    %v496 = vunpack.c.h.b16 %v391
    %v497 = vunpack.c.l.b16 %v392
    %v498 = vunpack.c.h.b16 %v392
    %v499 = vunpack.c.l.b16 %v393
    %v500 = vunpack.c.h.b16 %v393
    %v501 = vunpack.c.l.b16 %v394
    %v502 = vunpack.c.h.b16 %v394
    %v503 = vpack.c.b16 %v441, %v439
    %v504 = vpack.c.b16 %v442, %v440
    %v505 = vpack.c.b16 %v445, %v443
    %v506 = vpack.c.b16 %v446, %v444
    %v507 = vpack.c.b16 %v449, %v447
    %v508 = vpack.c.b16 %v450, %v448
    %v509 = vpack.c.b16 %v453, %v451
    %v510 = vpack.c.b16 %v454, %v452
    %v511 = vpack.c.b16 %v457, %v455
    %v512 = vpack.c.b16 %v458, %v456
    %v513 = vpack.c.b16 %v461, %v459
    %v514 = vpack.c.b16 %v462, %v460
    %v515 = vpack.c.b16 %v465, %v463
    %v516 = vpack.c.b16 %v466, %v464
    %v517 = vpack.c.b16 %v469, %v467
    %v518 = vpack.c.b16 %v470, %v468
    %v519 = vpack.c.b16 %v473, %v471
    %v520 = vpack.c.b16 %v474, %v472
    %v521 = vpack.c.b16 %v477, %v475
    %v522 = vpack.c.b16 %v478, %v476
    %v523 = vpack.c.b16 %v481, %v479
    %v524 = vpack.c.b16 %v482, %v480
    %v525 = vpack.c.b16 %v485, %v483
    %v526 = vpack.c.b16 %v486, %v484
    %v527 = vpack.c.b16 %v489, %v487
    %v528 = vpack.c.b16 %v490, %v488
    %v529 = vpack.c.b16 %v493, %v491
    %v530 = vpack.c.b16 %v494, %v492
    %v531 = vpack.c.b16 %v497, %v495
    %v532 = vpack.c.b16 %v498, %v496
    %v533 = vpack.c.b16 %v501, %v499
    %v534 = vpack.c.b16 %v502, %v500
    %567 = vmatprep.subr.bf16.mxu0 %v504
    %568 = vmatpush1.bf16.msra.mxu0 %v503
    %569 = vmatprep.subr.bf16.mxu0 %v506
    %570 = vmatpush1.bf16.msra.mxu0 %v505
    %571 = vmatprep.subr.bf16.mxu0 %v508
    %572 = vmatpush1.bf16.msra.mxu0 %v507
    %573 = vmatprep.subr.bf16.mxu0 %v510
    %574 = vmatpush1.bf16.msra.mxu0 %v509
    %575 = vmatprep.subr.bf16.mxu0 %v512
    %576 = vmatpush1.bf16.msra.mxu0 %v511
    %577 = vmatprep.subr.bf16.mxu0 %v514
    %578 = vmatpush1.bf16.msra.mxu0 %v513
    %579 = vmatprep.subr.bf16.mxu0 %v516
    %580 = vmatpush1.bf16.msra.mxu0 %v515
    %581 = vmatprep.subr.bf16.mxu0 %v518
    %582 = vmatpush1.bf16.msra.mxu0 %v517
    %583 = vmatprep.subr.bf16.mxu0 %v520
    %584 = vmatpush1.bf16.msra.mxu0 %v519
    %585 = vmatprep.subr.bf16.mxu0 %v522
    %586 = vmatpush1.bf16.msra.mxu0 %v521
    %587 = vmatprep.subr.bf16.mxu0 %v524
    %588 = vmatpush1.bf16.msra.mxu0 %v523
    %589 = vmatprep.subr.bf16.mxu0 %v526
    %590 = vmatpush1.bf16.msra.mxu0 %v525
    %591 = vmatprep.subr.bf16.mxu0 %v528
    %592 = vmatpush1.bf16.msra.mxu0 %v527
    %593 = vmatprep.subr.bf16.mxu0 %v530
    %594 = vmatpush1.bf16.msra.mxu0 %v529
    %595 = vmatprep.subr.bf16.mxu0 %v532
    %596 = vmatpush1.bf16.msra.mxu0 %v531
    %597 = vmatprep.subr.bf16.mxu0 %v534
    %598 = vmatpush1.bf16.msra.mxu0 %v533
    %599 = vmatprep.mubr.bf16.mxu0 %v119
    %600 = vmatmul.mubr.bf16.gmra.mrb[0].mxu0 %v118
    %v601 = vpop.f32.mrb[0].mxu0
    %v602 = vadd.f32 %v400, %v601
    %v603 = vpop.f32.mrb[0].mxu0
    %v604 = vadd.f32 %v404, %v603
    %v605 = vpop.f32.mrb[0].mxu0
    %v606 = vadd.f32 %v400, %v605
    %v607 = vpop.f32.mrb[0].mxu0
    %v608 = vadd.f32 %v404, %v607
    %609 = vdwg.mxu0
    %v610 = vmax.f32 %v602, 0.0
    %v611 = vmax.f32 %v604, 0.0
    %v612 = vmax.f32 %v606, 0.0
    %v613 = vmax.f32 %v608, 0.0
    %v614 = vpack.c.bf16 %v612, %v610
    %v615 = vpack.c.bf16 %v613, %v611
    %v616 = vld [vmem:[#allocation6 + $0x80] sm:$0xf]
    %v617 = vld [vmem:[#allocation6 + $0x84] sm:$0xf]
    %v618 = vld [vmem:[#allocation6 + $0x88] sm:$0xf]
    %v619 = vld [vmem:[#allocation6 + $0x8c] sm:$0xf]
    %v620 = vld [vmem:[#allocation6 + $0x90] sm:$0xf]
    %v621 = vld [vmem:[#allocation6 + $0x94] sm:$0xf]
    %v622 = vld [vmem:[#allocation6 + $0x98] sm:$0xf]
    %v623 = vld [vmem:[#allocation6 + $0x9c] sm:$0xf]
    %v624 = vld [vmem:[#allocation6 + $0xa0] sm:$0xf]
    %v625 = vld [vmem:[#allocation6 + $0xa4] sm:$0xf]
    %v626 = vld [vmem:[#allocation6 + $0xa8] sm:$0xf]
    %v627 = vld [vmem:[#allocation6 + $0xac] sm:$0xf]
    %v628 = vld [vmem:[#allocation6 + $0xb0] sm:$0xf]
    %v629 = vld [vmem:[#allocation6 + $0xb4] sm:$0xf]
    %v630 = vld [vmem:[#allocation6 + $0xb8] sm:$0xf]
    %v631 = vld [vmem:[#allocation6 + $0xbc] sm:$0xf]
    %v632 = vld [vmem:[#allocation6 + $0xc0] sm:$0xf]
    %v633 = vld [vmem:[#allocation6 + $0xc4] sm:$0xf]
    %v634 = vld [vmem:[#allocation6 + $0xc8] sm:$0xf]
    %v635 = vld [vmem:[#allocation6 + $0xcc] sm:$0xf]
    %v636 = vld [vmem:[#allocation6 + $0xd0] sm:$0xf]
    %v637 = vld [vmem:[#allocation6 + $0xd4] sm:$0xf]
    %v638 = vld [vmem:[#allocation6 + $0xd8] sm:$0xf]
    %v639 = vld [vmem:[#allocation6 + $0xdc] sm:$0xf]
    %v640 = vld [vmem:[#allocation6 + $0xe0] sm:$0xf]
    %v641 = vld [vmem:[#allocation6 + $0xe4] sm:$0xf]
    %v642 = vld [vmem:[#allocation6 + $0xe8] sm:$0xf]
    %v643 = vld [vmem:[#allocation6 + $0xec] sm:$0xf]
    %v644 = vld [vmem:[#allocation6 + $0xf0] sm:$0xf]
    %v645 = vld [vmem:[#allocation6 + $0xf4] sm:$0xf]
    %v646 = vld [vmem:[#allocation6 + $0xf8] sm:$0xf]
    %v647 = vld [vmem:[#allocation6 + $0xfc] sm:$0xf]
    %v680 = vunpack.c.l.b16 %v616
    %v681 = vunpack.c.l.b16 %v617
    %v682 = vunpack.c.l.b16 %v618
    %v683 = vunpack.c.l.b16 %v619
    %v684 = vunpack.c.l.b16 %v620
    %v685 = vunpack.c.l.b16 %v621
    %v686 = vunpack.c.l.b16 %v622
    %v687 = vunpack.c.l.b16 %v623
    %v688 = vunpack.c.l.b16 %v624
    %v689 = vunpack.c.l.b16 %v625
    %v690 = vunpack.c.l.b16 %v626
    %v691 = vunpack.c.l.b16 %v627
    %v692 = vunpack.c.l.b16 %v628
    %v693 = vunpack.c.l.b16 %v629
    %v694 = vunpack.c.l.b16 %v630
    %v695 = vunpack.c.l.b16 %v631
    %v696 = vunpack.c.l.b16 %v632
    %v697 = vunpack.c.l.b16 %v633
    %v698 = vunpack.c.l.b16 %v634
    %v699 = vunpack.c.l.b16 %v635
    %v700 = vunpack.c.l.b16 %v636
    %v701 = vunpack.c.l.b16 %v637
    %v702 = vunpack.c.l.b16 %v638
    %v703 = vunpack.c.l.b16 %v639
    %v704 = vunpack.c.l.b16 %v640
    %v705 = vunpack.c.l.b16 %v641
    %v706 = vunpack.c.l.b16 %v642
    %v707 = vunpack.c.l.b16 %v643
    %v708 = vunpack.c.l.b16 %v644
    %v709 = vunpack.c.l.b16 %v645
    %v710 = vunpack.c.l.b16 %v646
    %v711 = vunpack.c.l.b16 %v647
    %v712 = vpack.c.b16 %v681, %v680
    %v713 = vpack.c.b16 %v683, %v682
    %v714 = vpack.c.b16 %v685, %v684
    %v715 = vpack.c.b16 %v687, %v686
    %v716 = vpack.c.b16 %v689, %v688
    %v717 = vpack.c.b16 %v691, %v690
    %v718 = vpack.c.b16 %v693, %v692
    %v719 = vpack.c.b16 %v695, %v694
    %v720 = vpack.c.b16 %v697, %v696
    %v721 = vpack.c.b16 %v699, %v698
    %v722 = vpack.c.b16 %v701, %v700
    %v723 = vpack.c.b16 %v703, %v702
    %v724 = vpack.c.b16 %v705, %v704
    %v725 = vpack.c.b16 %v707, %v706
    %v726 = vpack.c.b16 %v709, %v708
    %v727 = vpack.c.b16 %v711, %v710
    %744 = vmatprep.subr.bf16.mxu0 0
    %745 = vmatpush1.bf16.msra.mxu0 %v712
    %746 = vmatprep.subr.bf16.mxu0 0
    %747 = vmatpush1.bf16.msra.mxu0 %v713
    %748 = vmatprep.subr.bf16.mxu0 0
    %749 = vmatpush1.bf16.msra.mxu0 %v714
    %750 = vmatprep.subr.bf16.mxu0 0
    %751 = vmatpush1.bf16.msra.mxu0 %v715
    %752 = vmatprep.subr.bf16.mxu0 0
    %753 = vmatpush1.bf16.msra.mxu0 %v716
    %754 = vmatprep.subr.bf16.mxu0 0
    %755 = vmatpush1.bf16.msra.mxu0 %v717
    %756 = vmatprep.subr.bf16.mxu0 0
    %757 = vmatpush1.bf16.msra.mxu0 %v718
    %758 = vmatprep.subr.bf16.mxu0 0
    %759 = vmatpush1.bf16.msra.mxu0 %v719
    %760 = vmatprep.subr.bf16.mxu0 0
    %761 = vmatpush1.bf16.msra.mxu0 %v720
    %762 = vmatprep.subr.bf16.mxu0 0
    %763 = vmatpush1.bf16.msra.mxu0 %v721
    %764 = vmatprep.subr.bf16.mxu0 0
    %765 = vmatpush1.bf16.msra.mxu0 %v722
    %766 = vmatprep.subr.bf16.mxu0 0
    %767 = vmatpush1.bf16.msra.mxu0 %v723
    %768 = vmatprep.subr.bf16.mxu0 0
    %769 = vmatpush1.bf16.msra.mxu0 %v724
    %770 = vmatprep.subr.bf16.mxu0 0
    %771 = vmatpush1.bf16.msra.mxu0 %v725
    %772 = vmatprep.subr.bf16.mxu0 0
    %773 = vmatpush1.bf16.msra.mxu0 %v726
    %774 = vmatprep.subr.bf16.mxu0 0
    %775 = vmatpush1.bf16.msra.mxu0 %v727
    %776 = vmatprep.mubr.bf16.mxu0 %v615
    %777 = vmatmul.mubr.bf16.gmra.mrb[0].mxu0 %v614
    %v778 = vpop.f32.mrb[0].mxu0
    %v779 = vadd.f32 0.0, %v778
    %v780 = vpop.f32.mrb[0].mxu0
    %v781 = vpop.f32.mrb[0].mxu0
    %v782 = vadd.f32 0.0, %v781
    %v783 = vpop.f32.mrb[0].mxu0
    %784 = vdwg.mxu0
    %v817 = vunpack.c.l.b16 %v331
    %v818 = vunpack.c.l.b16 %v332
    %v819 = vunpack.c.l.b16 %v333
    %v820 = vunpack.c.l.b16 %v334
    %v821 = vunpack.c.l.b16 %v335
    %v822 = vunpack.c.l.b16 %v336
    %v823 = vunpack.c.l.b16 %v337
    %v824 = vunpack.c.l.b16 %v338
    %v825 = vunpack.c.l.b16 %v339
    %v826 = vunpack.c.l.b16 %v340
    %v827 = vunpack.c.l.b16 %v341
    %v828 = vunpack.c.l.b16 %v342
    %v829 = vunpack.c.l.b16 %v343
    %v830 = vunpack.c.l.b16 %v344
    %v831 = vunpack.c.l.b16 %v345
    %v832 = vunpack.c.l.b16 %v346
    %v833 = vunpack.c.l.b16 %v347
    %v834 = vunpack.c.l.b16 %v348
    %v835 = vunpack.c.l.b16 %v349
    %v836 = vunpack.c.l.b16 %v350
    %v837 = vunpack.c.l.b16 %v351
    %v838 = vunpack.c.l.b16 %v352
    %v839 = vunpack.c.l.b16 %v353
    %v840 = vunpack.c.l.b16 %v354
    %v841 = vunpack.c.l.b16 %v355
    %v842 = vunpack.c.l.b16 %v356
    %v843 = vunpack.c.l.b16 %v357
    %v844 = vunpack.c.l.b16 %v358
    %v845 = vunpack.c.l.b16 %v359
    %v846 = vunpack.c.l.b16 %v360
    %v847 = vunpack.c.l.b16 %v361
    %v848 = vunpack.c.l.b16 %v362
    %v849 = vpack.c.b16 %v818, %v817
    %v850 = vpack.c.b16 %v820, %v819
    %v851 = vpack.c.b16 %v822, %v821
    %v852 = vpack.c.b16 %v824, %v823
    %v853 = vpack.c.b16 %v826, %v825
    %v854 = vpack.c.b16 %v828, %v827
    %v855 = vpack.c.b16 %v830, %v829
    %v856 = vpack.c.b16 %v832, %v831
    %v857 = vpack.c.b16 %v834, %v833
    %v858 = vpack.c.b16 %v836, %v835
    %v859 = vpack.c.b16 %v838, %v837
    %v860 = vpack.c.b16 %v840, %v839
    %v861 = vpack.c.b16 %v842, %v841
    %v862 = vpack.c.b16 %v844, %v843
    %v863 = vpack.c.b16 %v846, %v845
    %v864 = vpack.c.b16 %v848, %v847
    %881 = vmatprep.subr.bf16.mxu0 0
    %882 = vmatpush1.bf16.msra.mxu0 %v849
    %883 = vmatprep.subr.bf16.mxu0 0
    %884 = vmatpush1.bf16.msra.mxu0 %v850
    %885 = vmatprep.subr.bf16.mxu0 0
    %886 = vmatpush1.bf16.msra.mxu0 %v851
    %887 = vmatprep.subr.bf16.mxu0 0
    %888 = vmatpush1.bf16.msra.mxu0 %v852
    %889 = vmatprep.subr.bf16.mxu0 0
    %890 = vmatpush1.bf16.msra.mxu0 %v853
    %891 = vmatprep.subr.bf16.mxu0 0
    %892 = vmatpush1.bf16.msra.mxu0 %v854
    %893 = vmatprep.subr.bf16.mxu0 0
    %894 = vmatpush1.bf16.msra.mxu0 %v855
    %895 = vmatprep.subr.bf16.mxu0 0
    %896 = vmatpush1.bf16.msra.mxu0 %v856
    %897 = vmatprep.subr.bf16.mxu0 0
    %898 = vmatpush1.bf16.msra.mxu0 %v857
    %899 = vmatprep.subr.bf16.mxu0 0
    %900 = vmatpush1.bf16.msra.mxu0 %v858
    %901 = vmatprep.subr.bf16.mxu0 0
    %902 = vmatpush1.bf16.msra.mxu0 %v859
    %903 = vmatprep.subr.bf16.mxu0 0
    %904 = vmatpush1.bf16.msra.mxu0 %v860
    %905 = vmatprep.subr.bf16.mxu0 0
    %906 = vmatpush1.bf16.msra.mxu0 %v861
    %907 = vmatprep.subr.bf16.mxu0 0
    %908 = vmatpush1.bf16.msra.mxu0 %v862
    %909 = vmatprep.subr.bf16.mxu0 0
    %910 = vmatpush1.bf16.msra.mxu0 %v863
    %911 = vmatprep.subr.bf16.mxu0 0
    %912 = vmatpush1.bf16.msra.mxu0 %v864
    %913 = vmatprep.mubr.bf16.mxu0 %v330
    %914 = vmatmul.mubr.bf16.gmra.mrb[0].mxu0 %v329
    %v915 = vpop.f32.mrb[0].mxu0
    %v916 = vadd.f32 %v779, %v915
    %v917 = vpop.f32.mrb[0].mxu0
    %v918 = vpop.f32.mrb[0].mxu0
    %v919 = vadd.f32 %v782, %v918
    %v920 = vpop.f32.mrb[0].mxu0
    %921 = vdwg.mxu0
    %v922 = vld [vmem:[#allocation2 + $0x10] sm:$0xff]
    %v923 = vld [vmem:[#allocation2 + $0x30] sm:$0xff]
    %v924 = vld [vmem:[#allocation2 + $0x50] sm:$0xff]
    %v925 = vld [vmem:[#allocation2 + $0x70] sm:$0xff]
    %v926 = vld [vmem:[#allocation2 + $0x90] sm:$0xff]
    %v927 = vld [vmem:[#allocation2 + $0xb0] sm:$0xff]
    %v928 = vld [vmem:[#allocation2 + $0xd0] sm:$0xff]
    %v929 = vld [vmem:[#allocation2 + $0xf0] sm:$0xff]
    %v930 = vld [vmem:[#allocation2 + $0x110] sm:$0xff]
    %v931 = vld [vmem:[#allocation2 + $0x130] sm:$0xff]
    %v932 = vld [vmem:[#allocation2 + $0x150] sm:$0xff]
    %v933 = vld [vmem:[#allocation2 + $0x170] sm:$0xff]
    %v934 = vld [vmem:[#allocation2 + $0x190] sm:$0xff]
    %v935 = vld [vmem:[#allocation2 + $0x1b0] sm:$0xff]
    %v936 = vld [vmem:[#allocation2 + $0x1d0] sm:$0xff]
    %v937 = vld [vmem:[#allocation2 + $0x1f0] sm:$0xff]
    %v938 = vld [vmem:[#allocation2 + $0x210] sm:$0xff]
    %v939 = vld [vmem:[#allocation2 + $0x230] sm:$0xff]
    %v940 = vld [vmem:[#allocation2 + $0x250] sm:$0xff]
    %v941 = vld [vmem:[#allocation2 + $0x270] sm:$0xff]
    %v942 = vld [vmem:[#allocation2 + $0x290] sm:$0xff]
    %v943 = vld [vmem:[#allocation2 + $0x2b0] sm:$0xff]
    %v944 = vld [vmem:[#allocation2 + $0x2d0] sm:$0xff]
    %v945 = vld [vmem:[#allocation2 + $0x2f0] sm:$0xff]
    %v946 = vld [vmem:[#allocation2 + $0x310] sm:$0xff]
    %v947 = vld [vmem:[#allocation2 + $0x330] sm:$0xff]
    %v948 = vld [vmem:[#allocation2 + $0x350] sm:$0xff]
    %v949 = vld [vmem:[#allocation2 + $0x370] sm:$0xff]
    %v950 = vld [vmem:[#allocation2 + $0x390] sm:$0xff]
    %v951 = vld [vmem:[#allocation2 + $0x3b0] sm:$0xff]
    %v952 = vld [vmem:[#allocation2 + $0x3d0] sm:$0xff]
    %v953 = vld [vmem:[#allocation2 + $0x3f0] sm:$0xff]
    %v954 = vld [vmem:[#allocation4 + $0x4] sm:$0x3]
    %v956 = vlaneseq
    %v957 = vshrl.u32 %v956, 7
    %v958 = vsub.s32 0, %v957
    %v959 = vrot.slane %v954, %v958
    %v960 = vlaneseq
    %v961 = vshrl.u32 %v960, 7
    %v962 = vsub.s32 1, %v961
    %v963 = vrot.slane %v954, %v962
    %v998 = vunpack.c.l.b16 %v922
    %v999 = vunpack.c.h.b16 %v922
    %v1000 = vunpack.c.l.b16 %v923
    %v1001 = vunpack.c.h.b16 %v923
    %v1002 = vunpack.c.l.b16 %v924
    %v1003 = vunpack.c.h.b16 %v924
    %v1004 = vunpack.c.l.b16 %v925
    %v1005 = vunpack.c.h.b16 %v925
    %v1006 = vunpack.c.l.b16 %v926
    %v1007 = vunpack.c.h.b16 %v926
    %v1008 = vunpack.c.l.b16 %v927
    %v1009 = vunpack.c.h.b16 %v927
    %v1010 = vunpack.c.l.b16 %v928
    %v1011 = vunpack.c.h.b16 %v928
    %v1012 = vunpack.c.l.b16 %v929
    %v1013 = vunpack.c.h.b16 %v929
    %v1014 = vunpack.c.l.b16 %v930
    %v1015 = vunpack.c.h.b16 %v930
    %v1016 = vunpack.c.l.b16 %v931
    %v1017 = vunpack.c.h.b16 %v931
    %v1018 = vunpack.c.l.b16 %v932
    %v1019 = vunpack.c.h.b16 %v932
    %v1020 = vunpack.c.l.b16 %v933
    %v1021 = vunpack.c.h.b16 %v933
    %v1022 = vunpack.c.l.b16 %v934
    %v1023 = vunpack.c.h.b16 %v934
    %v1024 = vunpack.c.l.b16 %v935
    %v1025 = vunpack.c.h.b16 %v935
    %v1026 = vunpack.c.l.b16 %v936
    %v1027 = vunpack.c.h.b16 %v936
    %v1028 = vunpack.c.l.b16 %v937
    %v1029 = vunpack.c.h.b16 %v937
    %v1030 = vunpack.c.l.b16 %v938
    %v1031 = vunpack.c.h.b16 %v938
    %v1032 = vunpack.c.l.b16 %v939
    %v1033 = vunpack.c.h.b16 %v939
    %v1034 = vunpack.c.l.b16 %v940
    %v1035 = vunpack.c.h.b16 %v940
    %v1036 = vunpack.c.l.b16 %v941
    %v1037 = vunpack.c.h.b16 %v941
    %v1038 = vunpack.c.l.b16 %v942
    %v1039 = vunpack.c.h.b16 %v942
    %v1040 = vunpack.c.l.b16 %v943
    %v1041 = vunpack.c.h.b16 %v943
    %v1042 = vunpack.c.l.b16 %v944
    %v1043 = vunpack.c.h.b16 %v944
    %v1044 = vunpack.c.l.b16 %v945
    %v1045 = vunpack.c.h.b16 %v945
    %v1046 = vunpack.c.l.b16 %v946
    %v1047 = vunpack.c.h.b16 %v946
    %v1048 = vunpack.c.l.b16 %v947
    %v1049 = vunpack.c.h.b16 %v947
    %v1050 = vunpack.c.l.b16 %v948
    %v1051 = vunpack.c.h.b16 %v948
    %v1052 = vunpack.c.l.b16 %v949
    %v1053 = vunpack.c.h.b16 %v949
    %v1054 = vunpack.c.l.b16 %v950
    %v1055 = vunpack.c.h.b16 %v950
    %v1056 = vunpack.c.l.b16 %v951
    %v1057 = vunpack.c.h.b16 %v951
    %v1058 = vunpack.c.l.b16 %v952
    %v1059 = vunpack.c.h.b16 %v952
    %v1060 = vunpack.c.l.b16 %v953
    %v1061 = vunpack.c.h.b16 %v953
    %v1062 = vpack.c.b16 %v1000, %v998
    %v1063 = vpack.c.b16 %v1001, %v999
    %v1064 = vpack.c.b16 %v1004, %v1002
    %v1065 = vpack.c.b16 %v1005, %v1003
    %v1066 = vpack.c.b16 %v1008, %v1006
    %v1067 = vpack.c.b16 %v1009, %v1007
    %v1068 = vpack.c.b16 %v1012, %v1010
    %v1069 = vpack.c.b16 %v1013, %v1011
    %v1070 = vpack.c.b16 %v1016, %v1014
    %v1071 = vpack.c.b16 %v1017, %v1015
    %v1072 = vpack.c.b16 %v1020, %v1018
    %v1073 = vpack.c.b16 %v1021, %v1019
    %v1074 = vpack.c.b16 %v1024, %v1022
    %v1075 = vpack.c.b16 %v1025, %v1023
    %v1076 = vpack.c.b16 %v1028, %v1026
    %v1077 = vpack.c.b16 %v1029, %v1027
    %v1078 = vpack.c.b16 %v1032, %v1030
    %v1079 = vpack.c.b16 %v1033, %v1031
    %v1080 = vpack.c.b16 %v1036, %v1034
    %v1081 = vpack.c.b16 %v1037, %v1035
    %v1082 = vpack.c.b16 %v1040, %v1038
    %v1083 = vpack.c.b16 %v1041, %v1039
    %v1084 = vpack.c.b16 %v1044, %v1042
    %v1085 = vpack.c.b16 %v1045, %v1043
    %v1086 = vpack.c.b16 %v1048, %v1046
    %v1087 = vpack.c.b16 %v1049, %v1047
    %v1088 = vpack.c.b16 %v1052, %v1050
    %v1089 = vpack.c.b16 %v1053, %v1051
    %v1090 = vpack.c.b16 %v1056, %v1054
    %v1091 = vpack.c.b16 %v1057, %v1055
    %v1092 = vpack.c.b16 %v1060, %v1058
    %v1093 = vpack.c.b16 %v1061, %v1059
    %1126 = vmatprep.subr.bf16.mxu0 %v1063
    %1127 = vmatpush1.bf16.msra.mxu0 %v1062
    %1128 = vmatprep.subr.bf16.mxu0 %v1065
    %1129 = vmatpush1.bf16.msra.mxu0 %v1064
    %1130 = vmatprep.subr.bf16.mxu0 %v1067
    %1131 = vmatpush1.bf16.msra.mxu0 %v1066
    %1132 = vmatprep.subr.bf16.mxu0 %v1069
    %1133 = vmatpush1.bf16.msra.mxu0 %v1068
    %1134 = vmatprep.subr.bf16.mxu0 %v1071
    %1135 = vmatpush1.bf16.msra.mxu0 %v1070
    %1136 = vmatprep.subr.bf16.mxu0 %v1073
    %1137 = vmatpush1.bf16.msra.mxu0 %v1072
    %1138 = vmatprep.subr.bf16.mxu0 %v1075
    %1139 = vmatpush1.bf16.msra.mxu0 %v1074
    %1140 = vmatprep.subr.bf16.mxu0 %v1077
    %1141 = vmatpush1.bf16.msra.mxu0 %v1076
    %1142 = vmatprep.subr.bf16.mxu0 %v1079
    %1143 = vmatpush1.bf16.msra.mxu0 %v1078
    %1144 = vmatprep.subr.bf16.mxu0 %v1081
    %1145 = vmatpush1.bf16.msra.mxu0 %v1080
    %1146 = vmatprep.subr.bf16.mxu0 %v1083
    %1147 = vmatpush1.bf16.msra.mxu0 %v1082
    %1148 = vmatprep.subr.bf16.mxu0 %v1085
    %1149 = vmatpush1.bf16.msra.mxu0 %v1084
    %1150 = vmatprep.subr.bf16.mxu0 %v1087
    %1151 = vmatpush1.bf16.msra.mxu0 %v1086
    %1152 = vmatprep.subr.bf16.mxu0 %v1089
    %1153 = vmatpush1.bf16.msra.mxu0 %v1088
    %1154 = vmatprep.subr.bf16.mxu0 %v1091
    %1155 = vmatpush1.bf16.msra.mxu0 %v1090
    %1156 = vmatprep.subr.bf16.mxu0 %v1093
    %1157 = vmatpush1.bf16.msra.mxu0 %v1092
    %1158 = vmatprep.mubr.bf16.mxu0 %v119
    %1159 = vmatmul.mubr.bf16.gmra.mrb[0].mxu0 %v118
    %v1160 = vpop.f32.mrb[0].mxu0
    %v1161 = vadd.f32 %v959, %v1160
    %v1162 = vpop.f32.mrb[0].mxu0
    %v1163 = vadd.f32 %v963, %v1162
    %v1164 = vpop.f32.mrb[0].mxu0
    %v1165 = vadd.f32 %v959, %v1164
    %v1166 = vpop.f32.mrb[0].mxu0
    %v1167 = vadd.f32 %v963, %v1166
    %1168 = vdwg.mxu0
    %v1169 = vmax.f32 %v1161, 0.0
    %v1170 = vmax.f32 %v1163, 0.0
    %v1171 = vmax.f32 %v1165, 0.0
    %v1172 = vmax.f32 %v1167, 0.0
    %v1173 = vpack.c.bf16 %v1171, %v1169
    %v1174 = vpack.c.bf16 %v1172, %v1170
    %v1175 = vld [vmem:[#allocation6 + $0x100] sm:$0xf]
    %v1176 = vld [vmem:[#allocation6 + $0x104] sm:$0xf]
    %v1177 = vld [vmem:[#allocation6 + $0x108] sm:$0xf]
    %v1178 = vld [vmem:[#allocation6 + $0x10c] sm:$0xf]
    %v1179 = vld [vmem:[#allocation6 + $0x110] sm:$0xf]
    %v1180 = vld [vmem:[#allocation6 + $0x114] sm:$0xf]
    %v1181 = vld [vmem:[#allocation6 + $0x118] sm:$0xf]
    %v1182 = vld [vmem:[#allocation6 + $0x11c] sm:$0xf]
    %v1183 = vld [vmem:[#allocation6 + $0x120] sm:$0xf]
    %v1184 = vld [vmem:[#allocation6 + $0x124] sm:$0xf]
    %v1185 = vld [vmem:[#allocation6 + $0x128] sm:$0xf]
    %v1186 = vld [vmem:[#allocation6 + $0x12c] sm:$0xf]
    %v1187 = vld [vmem:[#allocation6 + $0x130] sm:$0xf]
    %v1188 = vld [vmem:[#allocation6 + $0x134] sm:$0xf]
    %v1189 = vld [vmem:[#allocation6 + $0x138] sm:$0xf]
    %v1190 = vld [vmem:[#allocation6 + $0x13c] sm:$0xf]
    %v1191 = vld [vmem:[#allocation6 + $0x140] sm:$0xf]
    %v1192 = vld [vmem:[#allocation6 + $0x144] sm:$0xf]
    %v1193 = vld [vmem:[#allocation6 + $0x148] sm:$0xf]
    %v1194 = vld [vmem:[#allocation6 + $0x14c] sm:$0xf]
    %v1195 = vld [vmem:[#allocation6 + $0x150] sm:$0xf]
    %v1196 = vld [vmem:[#allocation6 + $0x154] sm:$0xf]
    %v1197 = vld [vmem:[#allocation6 + $0x158] sm:$0xf]
    %v1198 = vld [vmem:[#allocation6 + $0x15c] sm:$0xf]
    %v1199 = vld [vmem:[#allocation6 + $0x160] sm:$0xf]
    %v1200 = vld [vmem:[#allocation6 + $0x164] sm:$0xf]
    %v1201 = vld [vmem:[#allocation6 + $0x168] sm:$0xf]
    %v1202 = vld [vmem:[#allocation6 + $0x16c] sm:$0xf]
    %v1203 = vld [vmem:[#allocation6 + $0x170] sm:$0xf]
    %v1204 = vld [vmem:[#allocation6 + $0x174] sm:$0xf]
    %v1205 = vld [vmem:[#allocation6 + $0x178] sm:$0xf]
    %v1206 = vld [vmem:[#allocation6 + $0x17c] sm:$0xf]
    %v1239 = vunpack.c.l.b16 %v1175
    %v1240 = vunpack.c.l.b16 %v1176
    %v1241 = vunpack.c.l.b16 %v1177
    %v1242 = vunpack.c.l.b16 %v1178
    %v1243 = vunpack.c.l.b16 %v1179
    %v1244 = vunpack.c.l.b16 %v1180
    %v1245 = vunpack.c.l.b16 %v1181
    %v1246 = vunpack.c.l.b16 %v1182
    %v1247 = vunpack.c.l.b16 %v1183
    %v1248 = vunpack.c.l.b16 %v1184
    %v1249 = vunpack.c.l.b16 %v1185
    %v1250 = vunpack.c.l.b16 %v1186
    %v1251 = vunpack.c.l.b16 %v1187
    %v1252 = vunpack.c.l.b16 %v1188
    %v1253 = vunpack.c.l.b16 %v1189
    %v1254 = vunpack.c.l.b16 %v1190
    %v1255 = vunpack.c.l.b16 %v1191
    %v1256 = vunpack.c.l.b16 %v1192
    %v1257 = vunpack.c.l.b16 %v1193
    %v1258 = vunpack.c.l.b16 %v1194
    %v1259 = vunpack.c.l.b16 %v1195
    %v1260 = vunpack.c.l.b16 %v1196
    %v1261 = vunpack.c.l.b16 %v1197
    %v1262 = vunpack.c.l.b16 %v1198
    %v1263 = vunpack.c.l.b16 %v1199
    %v1264 = vunpack.c.l.b16 %v1200
    %v1265 = vunpack.c.l.b16 %v1201
    %v1266 = vunpack.c.l.b16 %v1202
    %v1267 = vunpack.c.l.b16 %v1203
    %v1268 = vunpack.c.l.b16 %v1204
    %v1269 = vunpack.c.l.b16 %v1205
    %v1270 = vunpack.c.l.b16 %v1206
    %v1271 = vpack.c.b16 %v1240, %v1239
    %v1272 = vpack.c.b16 %v1242, %v1241
    %v1273 = vpack.c.b16 %v1244, %v1243
    %v1274 = vpack.c.b16 %v1246, %v1245
    %v1275 = vpack.c.b16 %v1248, %v1247
    %v1276 = vpack.c.b16 %v1250, %v1249
    %v1277 = vpack.c.b16 %v1252, %v1251
    %v1278 = vpack.c.b16 %v1254, %v1253
    %v1279 = vpack.c.b16 %v1256, %v1255
    %v1280 = vpack.c.b16 %v1258, %v1257
    %v1281 = vpack.c.b16 %v1260, %v1259
    %v1282 = vpack.c.b16 %v1262, %v1261
    %v1283 = vpack.c.b16 %v1264, %v1263
    %v1284 = vpack.c.b16 %v1266, %v1265
    %v1285 = vpack.c.b16 %v1268, %v1267
    %v1286 = vpack.c.b16 %v1270, %v1269
    %1303 = vmatprep.subr.bf16.mxu0 0
    %1304 = vmatpush1.bf16.msra.mxu0 %v1271
    %1305 = vmatprep.subr.bf16.mxu0 0
    %1306 = vmatpush1.bf16.msra.mxu0 %v1272
    %1307 = vmatprep.subr.bf16.mxu0 0
    %1308 = vmatpush1.bf16.msra.mxu0 %v1273
    %1309 = vmatprep.subr.bf16.mxu0 0
    %1310 = vmatpush1.bf16.msra.mxu0 %v1274
    %1311 = vmatprep.subr.bf16.mxu0 0
    %1312 = vmatpush1.bf16.msra.mxu0 %v1275
    %1313 = vmatprep.subr.bf16.mxu0 0
    %1314 = vmatpush1.bf16.msra.mxu0 %v1276
    %1315 = vmatprep.subr.bf16.mxu0 0
    %1316 = vmatpush1.bf16.msra.mxu0 %v1277
    %1317 = vmatprep.subr.bf16.mxu0 0
    %1318 = vmatpush1.bf16.msra.mxu0 %v1278
    %1319 = vmatprep.subr.bf16.mxu0 0
    %1320 = vmatpush1.bf16.msra.mxu0 %v1279
    %1321 = vmatprep.subr.bf16.mxu0 0
    %1322 = vmatpush1.bf16.msra.mxu0 %v1280
    %1323 = vmatprep.subr.bf16.mxu0 0
    %1324 = vmatpush1.bf16.msra.mxu0 %v1281
    %1325 = vmatprep.subr.bf16.mxu0 0
    %1326 = vmatpush1.bf16.msra.mxu0 %v1282
    %1327 = vmatprep.subr.bf16.mxu0 0
    %1328 = vmatpush1.bf16.msra.mxu0 %v1283
    %1329 = vmatprep.subr.bf16.mxu0 0
    %1330 = vmatpush1.bf16.msra.mxu0 %v1284
    %1331 = vmatprep.subr.bf16.mxu0 0
    %1332 = vmatpush1.bf16.msra.mxu0 %v1285
    %1333 = vmatprep.subr.bf16.mxu0 0
    %1334 = vmatpush1.bf16.msra.mxu0 %v1286
    %1335 = vmatprep.mubr.bf16.mxu0 %v1174
    %1336 = vmatmul.mubr.bf16.gmra.mrb[0].mxu0 %v1173
    %v1337 = vpop.f32.mrb[0].mxu0
    %v1338 = vadd.f32 0.0, %v1337
    %v1339 = vpop.f32.mrb[0].mxu0
    %v1340 = vpop.f32.mrb[0].mxu0
    %v1341 = vadd.f32 0.0, %v1340
    %v1342 = vpop.f32.mrb[0].mxu0
    %1343 = vdwg.mxu0
    %v1344 = vadd.f32 %v916, %v1338
    %v1345 = vadd.f32 %v919, %v1341
    %v1346 = vld [vmem:[#allocation2 + $0x18] sm:$0xff]
    %v1347 = vld [vmem:[#allocation2 + $0x38] sm:$0xff]
    %v1348 = vld [vmem:[#allocation2 + $0x58] sm:$0xff]
    %v1349 = vld [vmem:[#allocation2 + $0x78] sm:$0xff]
    %v1350 = vld [vmem:[#allocation2 + $0x98] sm:$0xff]
    %v1351 = vld [vmem:[#allocation2 + $0xb8] sm:$0xff]
    %v1352 = vld [vmem:[#allocation2 + $0xd8] sm:$0xff]
    %v1353 = vld [vmem:[#allocation2 + $0xf8] sm:$0xff]
    %v1354 = vld [vmem:[#allocation2 + $0x118] sm:$0xff]
    %v1355 = vld [vmem:[#allocation2 + $0x138] sm:$0xff]
    %v1356 = vld [vmem:[#allocation2 + $0x158] sm:$0xff]
    %v1357 = vld [vmem:[#allocation2 + $0x178] sm:$0xff]
    %v1358 = vld [vmem:[#allocation2 + $0x198] sm:$0xff]
    %v1359 = vld [vmem:[#allocation2 + $0x1b8] sm:$0xff]
    %v1360 = vld [vmem:[#allocation2 + $0x1d8] sm:$0xff]
    %v1361 = vld [vmem:[#allocation2 + $0x1f8] sm:$0xff]
    %v1362 = vld [vmem:[#allocation2 + $0x218] sm:$0xff]
    %v1363 = vld [vmem:[#allocation2 + $0x238] sm:$0xff]
    %v1364 = vld [vmem:[#allocation2 + $0x258] sm:$0xff]
    %v1365 = vld [vmem:[#allocation2 + $0x278] sm:$0xff]
    %v1366 = vld [vmem:[#allocation2 + $0x298] sm:$0xff]
    %v1367 = vld [vmem:[#allocation2 + $0x2b8] sm:$0xff]
    %v1368 = vld [vmem:[#allocation2 + $0x2d8] sm:$0xff]
    %v1369 = vld [vmem:[#allocation2 + $0x2f8] sm:$0xff]
    %v1370 = vld [vmem:[#allocation2 + $0x318] sm:$0xff]
    %v1371 = vld [vmem:[#allocation2 + $0x338] sm:$0xff]
    %v1372 = vld [vmem:[#allocation2 + $0x358] sm:$0xff]
    %v1373 = vld [vmem:[#allocation2 + $0x378] sm:$0xff]
    %v1374 = vld [vmem:[#allocation2 + $0x398] sm:$0xff]
    %v1375 = vld [vmem:[#allocation2 + $0x3b8] sm:$0xff]
    %v1376 = vld [vmem:[#allocation2 + $0x3d8] sm:$0xff]
    %v1377 = vld [vmem:[#allocation2 + $0x3f8] sm:$0xff]
    %v1378 = vld [vmem:[#allocation4 + $0x6] sm:$0x3]
    %v1380 = vlaneseq
    %v1381 = vshrl.u32 %v1380, 7
    %v1382 = vsub.s32 0, %v1381
    %v1383 = vrot.slane %v1378, %v1382
    %v1384 = vlaneseq
    %v1385 = vshrl.u32 %v1384, 7
    %v1386 = vsub.s32 1, %v1385
    %v1387 = vrot.slane %v1378, %v1386
    %v1422 = vunpack.c.l.b16 %v1346
    %v1423 = vunpack.c.h.b16 %v1346
    %v1424 = vunpack.c.l.b16 %v1347
    %v1425 = vunpack.c.h.b16 %v1347
    %v1426 = vunpack.c.l.b16 %v1348
    %v1427 = vunpack.c.h.b16 %v1348
    %v1428 = vunpack.c.l.b16 %v1349
    %v1429 = vunpack.c.h.b16 %v1349
    %v1430 = vunpack.c.l.b16 %v1350
    %v1431 = vunpack.c.h.b16 %v1350
    %v1432 = vunpack.c.l.b16 %v1351
    %v1433 = vunpack.c.h.b16 %v1351
    %v1434 = vunpack.c.l.b16 %v1352
    %v1435 = vunpack.c.h.b16 %v1352
    %v1436 = vunpack.c.l.b16 %v1353
    %v1437 = vunpack.c.h.b16 %v1353
    %v1438 = vunpack.c.l.b16 %v1354
    %v1439 = vunpack.c.h.b16 %v1354
    %v1440 = vunpack.c.l.b16 %v1355
    %v1441 = vunpack.c.h.b16 %v1355
    %v1442 = vunpack.c.l.b16 %v1356
    %v1443 = vunpack.c.h.b16 %v1356
    %v1444 = vunpack.c.l.b16 %v1357
    %v1445 = vunpack.c.h.b16 %v1357
    %v1446 = vunpack.c.l.b16 %v1358
    %v1447 = vunpack.c.h.b16 %v1358
    %v1448 = vunpack.c.l.b16 %v1359
    %v1449 = vunpack.c.h.b16 %v1359
    %v1450 = vunpack.c.l.b16 %v1360
    %v1451 = vunpack.c.h.b16 %v1360
    %v1452 = vunpack.c.l.b16 %v1361
    %v1453 = vunpack.c.h.b16 %v1361
    %v1454 = vunpack.c.l.b16 %v1362
    %v1455 = vunpack.c.h.b16 %v1362
    %v1456 = vunpack.c.l.b16 %v1363
    %v1457 = vunpack.c.h.b16 %v1363
    %v1458 = vunpack.c.l.b16 %v1364
    %v1459 = vunpack.c.h.b16 %v1364
    %v1460 = vunpack.c.l.b16 %v1365
    %v1461 = vunpack.c.h.b16 %v1365
    %v1462 = vunpack.c.l.b16 %v1366
    %v1463 = vunpack.c.h.b16 %v1366
    %v1464 = vunpack.c.l.b16 %v1367
    %v1465 = vunpack.c.h.b16 %v1367
    %v1466 = vunpack.c.l.b16 %v1368
    %v1467 = vunpack.c.h.b16 %v1368
    %v1468 = vunpack.c.l.b16 %v1369
    %v1469 = vunpack.c.h.b16 %v1369
    %v1470 = vunpack.c.l.b16 %v1370
    %v1471 = vunpack.c.h.b16 %v1370
    %v1472 = vunpack.c.l.b16 %v1371
    %v1473 = vunpack.c.h.b16 %v1371
    %v1474 = vunpack.c.l.b16 %v1372
    %v1475 = vunpack.c.h.b16 %v1372
    %v1476 = vunpack.c.l.b16 %v1373
    %v1477 = vunpack.c.h.b16 %v1373
    %v1478 = vunpack.c.l.b16 %v1374
    %v1479 = vunpack.c.h.b16 %v1374
    %v1480 = vunpack.c.l.b16 %v1375
    %v1481 = vunpack.c.h.b16 %v1375
    %v1482 = vunpack.c.l.b16 %v1376
    %v1483 = vunpack.c.h.b16 %v1376
    %v1484 = vunpack.c.l.b16 %v1377
    %v1485 = vunpack.c.h.b16 %v1377
    %v1486 = vpack.c.b16 %v1424, %v1422
    %v1487 = vpack.c.b16 %v1425, %v1423
    %v1488 = vpack.c.b16 %v1428, %v1426
    %v1489 = vpack.c.b16 %v1429, %v1427
    %v1490 = vpack.c.b16 %v1432, %v1430
    %v1491 = vpack.c.b16 %v1433, %v1431
    %v1492 = vpack.c.b16 %v1436, %v1434
    %v1493 = vpack.c.b16 %v1437, %v1435
    %v1494 = vpack.c.b16 %v1440, %v1438
    %v1495 = vpack.c.b16 %v1441, %v1439
    %v1496 = vpack.c.b16 %v1444, %v1442
    %v1497 = vpack.c.b16 %v1445, %v1443
    %v1498 = vpack.c.b16 %v1448, %v1446
    %v1499 = vpack.c.b16 %v1449, %v1447
    %v1500 = vpack.c.b16 %v1452, %v1450
    %v1501 = vpack.c.b16 %v1453, %v1451
    %v1502 = vpack.c.b16 %v1456, %v1454
    %v1503 = vpack.c.b16 %v1457, %v1455
    %v1504 = vpack.c.b16 %v1460, %v1458
    %v1505 = vpack.c.b16 %v1461, %v1459
    %v1506 = vpack.c.b16 %v1464, %v1462
    %v1507 = vpack.c.b16 %v1465, %v1463
    %v1508 = vpack.c.b16 %v1468, %v1466
    %v1509 = vpack.c.b16 %v1469, %v1467
    %v1510 = vpack.c.b16 %v1472, %v1470
    %v1511 = vpack.c.b16 %v1473, %v1471
    %v1512 = vpack.c.b16 %v1476, %v1474
    %v1513 = vpack.c.b16 %v1477, %v1475
    %v1514 = vpack.c.b16 %v1480, %v1478
    %v1515 = vpack.c.b16 %v1481, %v1479
    %v1516 = vpack.c.b16 %v1484, %v1482
    %v1517 = vpack.c.b16 %v1485, %v1483
    %1550 = vmatprep.subr.bf16.mxu0 %v1487
    %1551 = vmatpush1.bf16.msra.mxu0 %v1486
    %1552 = vmatprep.subr.bf16.mxu0 %v1489
    %1553 = vmatpush1.bf16.msra.mxu0 %v1488
    %1554 = vmatprep.subr.bf16.mxu0 %v1491
    %1555 = vmatpush1.bf16.msra.mxu0 %v1490
    %1556 = vmatprep.subr.bf16.mxu0 %v1493
    %1557 = vmatpush1.bf16.msra.mxu0 %v1492
    %1558 = vmatprep.subr.bf16.mxu0 %v1495
    %1559 = vmatpush1.bf16.msra.mxu0 %v1494
    %1560 = vmatprep.subr.bf16.mxu0 %v1497
    %1561 = vmatpush1.bf16.msra.mxu0 %v1496
    %1562 = vmatprep.subr.bf16.mxu0 %v1499
    %1563 = vmatpush1.bf16.msra.mxu0 %v1498
    %1564 = vmatprep.subr.bf16.mxu0 %v1501
    %1565 = vmatpush1.bf16.msra.mxu0 %v1500
    %1566 = vmatprep.subr.bf16.mxu0 %v1503
    %1567 = vmatpush1.bf16.msra.mxu0 %v1502
    %1568 = vmatprep.subr.bf16.mxu0 %v1505
    %1569 = vmatpush1.bf16.msra.mxu0 %v1504
    %1570 = vmatprep.subr.bf16.mxu0 %v1507
    %1571 = vmatpush1.bf16.msra.mxu0 %v1506
    %1572 = vmatprep.subr.bf16.mxu0 %v1509
    %1573 = vmatpush1.bf16.msra.mxu0 %v1508
    %1574 = vmatprep.subr.bf16.mxu0 %v1511
    %1575 = vmatpush1.bf16.msra.mxu0 %v1510
    %1576 = vmatprep.subr.bf16.mxu0 %v1513
    %1577 = vmatpush1.bf16.msra.mxu0 %v1512
    %1578 = vmatprep.subr.bf16.mxu0 %v1515
    %1579 = vmatpush1.bf16.msra.mxu0 %v1514
    %1580 = vmatprep.subr.bf16.mxu0 %v1517
    %1581 = vmatpush1.bf16.msra.mxu0 %v1516
    %1582 = vmatprep.mubr.bf16.mxu0 %v119
    %1583 = vmatmul.mubr.bf16.gmra.mrb[0].mxu0 %v118
    %v1584 = vpop.f32.mrb[0].mxu0
    %v1585 = vadd.f32 %v1383, %v1584
    %v1586 = vpop.f32.mrb[0].mxu0
    %v1587 = vadd.f32 %v1387, %v1586
    %v1588 = vpop.f32.mrb[0].mxu0
    %v1589 = vadd.f32 %v1383, %v1588
    %v1590 = vpop.f32.mrb[0].mxu0
    %v1591 = vadd.f32 %v1387, %v1590
    %1592 = vdwg.mxu0
    %v1593 = vmax.f32 %v1585, 0.0
    %v1594 = vmax.f32 %v1587, 0.0
    %v1595 = vmax.f32 %v1589, 0.0
    %v1596 = vmax.f32 %v1591, 0.0
    %v1597 = vpack.c.bf16 %v1595, %v1593
    %v1598 = vpack.c.bf16 %v1596, %v1594
    %v1599 = vld [vmem:[#allocation6 + $0x180] sm:$0xf]
    %v1600 = vld [vmem:[#allocation6 + $0x184] sm:$0xf]
    %v1601 = vld [vmem:[#allocation6 + $0x188] sm:$0xf]
    %v1602 = vld [vmem:[#allocation6 + $0x18c] sm:$0xf]
    %v1603 = vld [vmem:[#allocation6 + $0x190] sm:$0xf]
    %v1604 = vld [vmem:[#allocation6 + $0x194] sm:$0xf]
    %v1605 = vld [vmem:[#allocation6 + $0x198] sm:$0xf]
    %v1606 = vld [vmem:[#allocation6 + $0x19c] sm:$0xf]
    %v1607 = vld [vmem:[#allocation6 + $0x1a0] sm:$0xf]
    %v1608 = vld [vmem:[#allocation6 + $0x1a4] sm:$0xf]
    %v1609 = vld [vmem:[#allocation6 + $0x1a8] sm:$0xf]
    %v1610 = vld [vmem:[#allocation6 + $0x1ac] sm:$0xf]
    %v1611 = vld [vmem:[#allocation6 + $0x1b0] sm:$0xf]
    %v1612 = vld [vmem:[#allocation6 + $0x1b4] sm:$0xf]
    %v1613 = vld [vmem:[#allocation6 + $0x1b8] sm:$0xf]
    %v1614 = vld [vmem:[#allocation6 + $0x1bc] sm:$0xf]
    %v1615 = vld [vmem:[#allocation6 + $0x1c0] sm:$0xf]
    %v1616 = vld [vmem:[#allocation6 + $0x1c4] sm:$0xf]
    %v1617 = vld [vmem:[#allocation6 + $0x1c8] sm:$0xf]
    %v1618 = vld [vmem:[#allocation6 + $0x1cc] sm:$0xf]
    %v1619 = vld [vmem:[#allocation6 + $0x1d0] sm:$0xf]
    %v1620 = vld [vmem:[#allocation6 + $0x1d4] sm:$0xf]
    %v1621 = vld [vmem:[#allocation6 + $0x1d8] sm:$0xf]
    %v1622 = vld [vmem:[#allocation6 + $0x1dc] sm:$0xf]
    %v1623 = vld [vmem:[#allocation6 + $0x1e0] sm:$0xf]
    %v1624 = vld [vmem:[#allocation6 + $0x1e4] sm:$0xf]
    %v1625 = vld [vmem:[#allocation6 + $0x1e8] sm:$0xf]
    %v1626 = vld [vmem:[#allocation6 + $0x1ec] sm:$0xf]
    %v1627 = vld [vmem:[#allocation6 + $0x1f0] sm:$0xf]
    %v1628 = vld [vmem:[#allocation6 + $0x1f4] sm:$0xf]
    %v1629 = vld [vmem:[#allocation6 + $0x1f8] sm:$0xf]
    %v1630 = vld [vmem:[#allocation6 + $0x1fc] sm:$0xf]
    %v1663 = vunpack.c.l.b16 %v1599
    %v1664 = vunpack.c.l.b16 %v1600
    %v1665 = vunpack.c.l.b16 %v1601
    %v1666 = vunpack.c.l.b16 %v1602
    %v1667 = vunpack.c.l.b16 %v1603
    %v1668 = vunpack.c.l.b16 %v1604
    %v1669 = vunpack.c.l.b16 %v1605
    %v1670 = vunpack.c.l.b16 %v1606
    %v1671 = vunpack.c.l.b16 %v1607
    %v1672 = vunpack.c.l.b16 %v1608
    %v1673 = vunpack.c.l.b16 %v1609
    %v1674 = vunpack.c.l.b16 %v1610
    %v1675 = vunpack.c.l.b16 %v1611
    %v1676 = vunpack.c.l.b16 %v1612
    %v1677 = vunpack.c.l.b16 %v1613
    %v1678 = vunpack.c.l.b16 %v1614
    %v1679 = vunpack.c.l.b16 %v1615
    %v1680 = vunpack.c.l.b16 %v1616
    %v1681 = vunpack.c.l.b16 %v1617
    %v1682 = vunpack.c.l.b16 %v1618
    %v1683 = vunpack.c.l.b16 %v1619
    %v1684 = vunpack.c.l.b16 %v1620
    %v1685 = vunpack.c.l.b16 %v1621
    %v1686 = vunpack.c.l.b16 %v1622
    %v1687 = vunpack.c.l.b16 %v1623
    %v1688 = vunpack.c.l.b16 %v1624
    %v1689 = vunpack.c.l.b16 %v1625
    %v1690 = vunpack.c.l.b16 %v1626
    %v1691 = vunpack.c.l.b16 %v1627
    %v1692 = vunpack.c.l.b16 %v1628
    %v1693 = vunpack.c.l.b16 %v1629
    %v1694 = vunpack.c.l.b16 %v1630
    %v1695 = vpack.c.b16 %v1664, %v1663
    %v1696 = vpack.c.b16 %v1666, %v1665
    %v1697 = vpack.c.b16 %v1668, %v1667
    %v1698 = vpack.c.b16 %v1670, %v1669
    %v1699 = vpack.c.b16 %v1672, %v1671
    %v1700 = vpack.c.b16 %v1674, %v1673
    %v1701 = vpack.c.b16 %v1676, %v1675
    %v1702 = vpack.c.b16 %v1678, %v1677
    %v1703 = vpack.c.b16 %v1680, %v1679
    %v1704 = vpack.c.b16 %v1682, %v1681
    %v1705 = vpack.c.b16 %v1684, %v1683
    %v1706 = vpack.c.b16 %v1686, %v1685
    %v1707 = vpack.c.b16 %v1688, %v1687
    %v1708 = vpack.c.b16 %v1690, %v1689
    %v1709 = vpack.c.b16 %v1692, %v1691
    %v1710 = vpack.c.b16 %v1694, %v1693
    %1727 = vmatprep.subr.bf16.mxu0 0
    %1728 = vmatpush1.bf16.msra.mxu0 %v1695
    %1729 = vmatprep.subr.bf16.mxu0 0
    %1730 = vmatpush1.bf16.msra.mxu0 %v1696
    %1731 = vmatprep.subr.bf16.mxu0 0
    %1732 = vmatpush1.bf16.msra.mxu0 %v1697
    %1733 = vmatprep.subr.bf16.mxu0 0
    %1734 = vmatpush1.bf16.msra.mxu0 %v1698
    %1735 = vmatprep.subr.bf16.mxu0 0
    %1736 = vmatpush1.bf16.msra.mxu0 %v1699
    %1737 = vmatprep.subr.bf16.mxu0 0
    %1738 = vmatpush1.bf16.msra.mxu0 %v1700
    %1739 = vmatprep.subr.bf16.mxu0 0
    %1740 = vmatpush1.bf16.msra.mxu0 %v1701
    %1741 = vmatprep.subr.bf16.mxu0 0
    %1742 = vmatpush1.bf16.msra.mxu0 %v1702
    %1743 = vmatprep.subr.bf16.mxu0 0
    %1744 = vmatpush1.bf16.msra.mxu0 %v1703
    %1745 = vmatprep.subr.bf16.mxu0 0
    %1746 = vmatpush1.bf16.msra.mxu0 %v1704
    %1747 = vmatprep.subr.bf16.mxu0 0
    %1748 = vmatpush1.bf16.msra.mxu0 %v1705
    %1749 = vmatprep.subr.bf16.mxu0 0
    %1750 = vmatpush1.bf16.msra.mxu0 %v1706
    %1751 = vmatprep.subr.bf16.mxu0 0
    %1752 = vmatpush1.bf16.msra.mxu0 %v1707
    %1753 = vmatprep.subr.bf16.mxu0 0
    %1754 = vmatpush1.bf16.msra.mxu0 %v1708
    %1755 = vmatprep.subr.bf16.mxu0 0
    %1756 = vmatpush1.bf16.msra.mxu0 %v1709
    %1757 = vmatprep.subr.bf16.mxu0 0
    %1758 = vmatpush1.bf16.msra.mxu0 %v1710
    %1759 = vmatprep.mubr.bf16.mxu0 %v1598
    %1760 = vmatmul.mubr.bf16.gmra.mrb[0].mxu0 %v1597
    %v1761 = vpop.f32.mrb[0].mxu0
    %v1762 = vadd.f32 0.0, %v1761
    %v1763 = vpop.f32.mrb[0].mxu0
    %v1764 = vpop.f32.mrb[0].mxu0
    %v1765 = vadd.f32 0.0, %v1764
    %v1766 = vpop.f32.mrb[0].mxu0
    %1767 = vdwg.mxu0
    %v1768 = vadd.f32 %v1344, %v1762
    %v1769 = vadd.f32 %v1345, %v1765
    %v1770 = vld [vmem:[%s4] sm:$0x1]
    %v1772 = vlaneseq
    %v1773 = vshrl.u32 %v1772, 7
    %v1774 = vsub.s32 0, %v1773
    %v1775 = vrot.slane %v1770, %v1774
    %v1777 = vadd.f32 %v1768, %v1775
    %v1778 = vadd.f32 %v1769, %v1775
    %v1779 = vmax.f32 %v1777, 0.0
    %v1780 = vmax.f32 %v1778, 0.0
    %v1781 = vpack.c.bf16 %v1780, %v1779
    %v1782 = vld [vmem:[%s5] sm:$0xf]
    %v1783 = vld [vmem:[%s5 + $0x4] sm:$0xf]
    %v1784 = vld [vmem:[%s5 + $0x8] sm:$0xf]
    %v1785 = vld [vmem:[%s5 + $0xc] sm:$0xf]
    %v1786 = vld [vmem:[%s5 + $0x10] sm:$0xf]
    %v1787 = vld [vmem:[%s5 + $0x14] sm:$0xf]
    %v1788 = vld [vmem:[%s5 + $0x18] sm:$0xf]
    %v1789 = vld [vmem:[%s5 + $0x1c] sm:$0xf]
    %v1790 = vld [vmem:[%s5 + $0x20] sm:$0xf]
    %v1791 = vld [vmem:[%s5 + $0x24] sm:$0xf]
    %v1792 = vld [vmem:[%s5 + $0x28] sm:$0xf]
    %v1793 = vld [vmem:[%s5 + $0x2c] sm:$0xf]
    %v1794 = vld [vmem:[%s5 + $0x30] sm:$0xf]
    %v1795 = vld [vmem:[%s5 + $0x34] sm:$0xf]
    %v1796 = vld [vmem:[%s5 + $0x38] sm:$0xf]
    %v1797 = vld [vmem:[%s5 + $0x3c] sm:$0xf]
    %v1798 = vld [vmem:[%s6] sm:$0x1]
    %v1800 = vlaneseq
    %v1801 = vshrl.u32 %v1800, 7
    %v1802 = vsub.s32 0, %v1801
    %v1803 = vrot.slane %v1798, %v1802
    %v1821 = vunpack.c.l.b16 %v1782
    %v1822 = vunpack.c.l.b16 %v1783
    %v1823 = vunpack.c.l.b16 %v1784
    %v1824 = vunpack.c.l.b16 %v1785
    %v1825 = vunpack.c.l.b16 %v1786
    %v1826 = vunpack.c.l.b16 %v1787
    %v1827 = vunpack.c.l.b16 %v1788
    %v1828 = vunpack.c.l.b16 %v1789
    %v1829 = vunpack.c.l.b16 %v1790
    %v1830 = vunpack.c.l.b16 %v1791
    %v1831 = vunpack.c.l.b16 %v1792
    %v1832 = vunpack.c.l.b16 %v1793
    %v1833 = vunpack.c.l.b16 %v1794
    %v1834 = vunpack.c.l.b16 %v1795
    %v1835 = vunpack.c.l.b16 %v1796
    %v1836 = vunpack.c.l.b16 %v1797
    %v1837 = vpack.c.b16 %v1822, %v1821
    %v1838 = vpack.c.b16 %v1824, %v1823
    %v1839 = vpack.c.b16 %v1826, %v1825
    %v1840 = vpack.c.b16 %v1828, %v1827
    %v1841 = vpack.c.b16 %v1830, %v1829
    %v1842 = vpack.c.b16 %v1832, %v1831
    %v1843 = vpack.c.b16 %v1834, %v1833
    %v1844 = vpack.c.b16 %v1836, %v1835
    %1853 = vmatprep.subr.bf16.mxu0 0
    %1854 = vmatpush1.bf16.msra.mxu0 %v1837
    %1855 = vmatprep.subr.bf16.mxu0 0
    %1856 = vmatpush1.bf16.msra.mxu0 %v1838
    %1857 = vmatprep.subr.bf16.mxu0 0
    %1858 = vmatpush1.bf16.msra.mxu0 %v1839
    %1859 = vmatprep.subr.bf16.mxu0 0
    %1860 = vmatpush1.bf16.msra.mxu0 %v1840
    %1861 = vmatprep.subr.bf16.mxu0 0
    %1862 = vmatpush1.bf16.msra.mxu0 %v1841
    %1863 = vmatprep.subr.bf16.mxu0 0
    %1864 = vmatpush1.bf16.msra.mxu0 %v1842
    %1865 = vmatprep.subr.bf16.mxu0 0
    %1866 = vmatpush1.bf16.msra.mxu0 %v1843
    %1867 = vmatprep.subr.bf16.mxu0 0
    %1868 = vmatpush1.bf16.msra.mxu0 %v1844
    %1869 = vmatprep.subr.bf16.mxu0 0
    %1870 = vmatpush1.bf16.msra.mxu0 0
    %1871 = vmatprep.subr.bf16.mxu0 0
    %1872 = vmatpush1.bf16.msra.mxu0 0
    %1873 = vmatprep.subr.bf16.mxu0 0
    %1874 = vmatpush1.bf16.msra.mxu0 0
    %1875 = vmatprep.subr.bf16.mxu0 0
    %1876 = vmatpush1.bf16.msra.mxu0 0
    %1877 = vmatprep.subr.bf16.mxu0 0
    %1878 = vmatpush1.bf16.msra.mxu0 0
    %1879 = vmatprep.subr.bf16.mxu0 0
    %1880 = vmatpush1.bf16.msra.mxu0 0
    %1881 = vmatprep.subr.bf16.mxu0 0
    %1882 = vmatpush1.bf16.msra.mxu0 0
    %1883 = vmatprep.subr.bf16.mxu0 0
    %1884 = vmatpush1.bf16.msra.mxu0 0
    %1885 = vmatprep.mubr.bf16.mxu0 0
    %1886 = vmatmul.mubr.bf16.gmra.mrb[0].mxu0 %v1781
    %v1887 = vpop.f32.mrb[0].mxu0
    %v1888 = vadd.f32 %v1803, %v1887
    %v1889 = vpop.f32.mrb[0].mxu0
    %v1890 = vpop.f32.mrb[0].mxu0
    %v1891 = vadd.f32 %v1803, %v1890
    %v1892 = vpop.f32.mrb[0].mxu0
    %1893 = vdwg.mxu0
    %1894 = vst [vmem:[%s7] sm:$0xff] %v1888
    %1895 = vst [vmem:[%s7 + $0x8] sm:$0xff] %v1891
    // Predicated region
    $region42: #{dqn_forward.1} parent=1 // pred_check
      _
    $region43: #{dqn_forward.1} parent=1 // pred_check_branch
      %1897 = sbr.rel (0) target = $region45
    $region44: #{dqn_forward.1} parent=1 // pred_region
      _
    $region45: #{dqn_forward.1} parent=1 // pred_fallthru
      _
    // Predicated region
    $region46: #{dqn_forward.1} parent=1 // pred_check
      _
    $region47: #{dqn_forward.1} parent=1 // pred_check_branch
      %1899 = sbr.rel (0) target = $region49
    $region48: #{dqn_forward.1} parent=1 // pred_region
      _
    $region49: #{dqn_forward.1} parent=1 // pred_fallthru
      _
    %1900 = vsyncpa [#allocation3], 1
    %1901 = vsyncpa [#allocation5], 1

</llo_original>
